<compile_context>
chip_gen: v7x
topology: tpu7x:2x2x1
jax: 0.10.0
libtpu: 0.0.40
codegen_flags: <defaults>
</compile_context>

<pallas_src>
import jax
import jax.numpy as jnp
from jax.experimental import pallas as pl
from jax.experimental.pallas import tpu as pltpu

EPS = 1e-5   # PyTorch BatchNorm default eps
KPAD = 128   # contraction lanes: exactly one MXU pass per column tile
CPAD = 128   # lane-dense padding for the class/output dimension


# ----------------------------- Pallas kernel -------------------------------


def fused_kernel(p_ref, cw_ref, cb_ref, pool_ref, w1_ref, b1_ref, w2_ref, b2_ref,
                 o_ref):
    # Conv3x3(pad=1) as an im2col matmul, + bias + ReLU (bias/ReLU on the VPU,
    # free under MXU slack).
    s = jnp.dot(p_ref[...], cw_ref[...], preferred_element_type=jnp.float32)  # (NHW, F)
    s = jnp.maximum(s + cb_ref[...], 0.0)
    # AdaptiveAvgPool2d(1) + flatten: block-diagonal 1/HW pooling matrix on the
    # MXU; also pads the batch to 8 sublanes (zero rows) for dense stores.
    feats = jnp.dot(pool_ref[...], s.astype(jnp.bfloat16),
                    preferred_element_type=jnp.float32)                        # (Npad, F)
    # Head: BN1d layers are pre-folded into w1/b1 and w2/b2 in the glue;
    # Dropout(0.5) is identity in eval mode.
    h = jnp.dot(feats.astype(jnp.bfloat16), w1_ref[...],
                preferred_element_type=jnp.float32) + b1_ref[...]
    h = jnp.maximum(h, 0.0)                                                    # ReLU(True)
    o_ref[...] = jnp.dot(h.astype(jnp.bfloat16), w2_ref[...],
                         preferred_element_type=jnp.float32) + b2_ref[...]


# ------------------------------- JAX glue ----------------------------------


def im2col_3x3_pad1(x):
    """x: (N, C, H, W) -> patches (N, H*W, C*9), K ordered as (C, kh, kw)."""
    n, c, h, w = x.shape
    xp = jnp.pad(x, ((0, 0), (0, 0), (1, 1), (1, 1)))
    taps = [xp[:, :, di:di + h, dj:dj + w] for di in range(3) for dj in range(3)]
    p = jnp.stack(taps, axis=2)                               # (N, C, 9, H, W)
    return p.transpose(0, 3, 4, 1, 2).reshape(n, h * w, c * 9)


def _fold_bn_linear(g, be, rm, rv, w, b):
    """Fold eval-mode BatchNorm1d (applied right before a Linear) into (w, b)."""
    a = g * jax.lax.rsqrt(rv + EPS)          # (1, F)  per-feature scale
    c = be - rm * a                          # (1, F)  per-feature shift
    w_f = a.reshape(-1, 1) * w               # (F, out)
    b_f = c @ w + b                          # (1, out)
    return w_f, b_f


@jax.jit
def fine_tune_model_forward(x, params):
    n, c, h, w = x.shape
    f = params["conv_w"].shape[0]
    nc = params["w2"].shape[1]
    hw = h * w
    k = c * 9
    nhw = n * hw                              # 512 rows here (multiple of 8)
    npad = max(8, -(-n // 8) * 8)             # batch padded to full sublane tile

    # ---- body operands: im2col, K zero-padded to one full 128-lane MXU pass ----
    # TODO(synk): for large H*W (e.g. 224x224) tile the HW axis with an
    # 'arbitrary' reduction grid axis accumulating the pool sum in VMEM scratch
    # to stay under v7x's 64 MiB VMEM; unnecessary at these shapes.
    patches = im2col_3x3_pad1(x).reshape(nhw, k)
    patches = jnp.pad(patches, ((0, 0), (0, KPAD - k))).astype(jnp.bfloat16)
    cw = jnp.pad(params["conv_w"].reshape(f, k).T,
                 ((0, KPAD - k), (0, 0))).astype(jnp.bfloat16)                 # (KPAD, F)
    cb = params["conv_b"].reshape(1, f).astype(jnp.float32)

    # ---- pooling matrix: block-diagonal mean over each image's HW rows ----
    row = jnp.arange(npad, dtype=jnp.int32)[:, None]
    col = (jnp.arange(nhw, dtype=jnp.int32) // hw)[None, :]
    pool = jnp.where(row == col, 1.0 / hw, 0.0).astype(jnp.bfloat16)           # (Npad, NHW)

    # ---- head operands: fold the two BN1d layers into the Linears; pad classes ----
    w1p, b1p = _fold_bn_linear(params["g1"], params["be1"], params["rm1"],
                               params["rv1"], params["w1"], params["bb1"])
    w2p, b2p = _fold_bn_linear(params["g2"], params["be2"], params["rm2"],
                               params["rv2"], params["w2"], params["bb2"])
    w1p = w1p.astype(jnp.bfloat16)
    b1p = b1p.astype(jnp.float32)
    w2p = jnp.pad(w2p, ((0, 0), (0, CPAD - nc))).astype(jnp.bfloat16)
    b2p = jnp.pad(b2p, ((0, 0), (0, CPAD - nc))).astype(jnp.float32)
    hidden = w1p.shape[1]

    def full(shape):
        nd = len(shape)
        return pl.BlockSpec(shape, lambda i, _nd=nd: (0,) * _nd)

    out = pl.pallas_call(
        fused_kernel,
        out_shape=jax.ShapeDtypeStruct((npad, CPAD), jnp.float32),
        grid=(1,),
        in_specs=[
            full((nhw, KPAD)),       # im2col patches
            full((KPAD, f)),         # conv weight (flattened)
            full((1, f)),            # conv bias
            full((npad, nhw)),       # pooling matrix
            full((f, hidden)),       # folded w1 (BN1 absorbed)
            full((1, hidden)),       # folded b1
            full((hidden, CPAD)),    # folded w2 (BN2 absorbed), lane-padded
            full((1, CPAD)),         # folded b2, lane-padded
        ],
        out_specs=pl.BlockSpec((npad, CPAD), lambda i: (0, 0)),
        compiler_params=pltpu.CompilerParams(
            dimension_semantics=("arbitrary",)),
    )(patches, cw, cb, pool, w1p, b1p, w2p, b2p)

    return out[:n, :nc]


# ----------------------------- parameter init ------------------------------


def init_params(key, in_ch, num_filters, num_classes, hidden=512):
    ks = jax.random.split(key, 8)
    p = {}
    # body: Conv2d(in_ch, num_filters, 3, padding=1)
    p["conv_w"] = 0.1 * jax.random.normal(ks[0], (num_filters, in_ch, 3, 3), jnp.float32)
    p["conv_b"] = 0.1 * jax.random.normal(ks[1], (num_filters,), jnp.float32)
    # head BatchNorm1d(num_filters)
    p["g1"] = 1.0 + 0.05 * jax.random.normal(ks[2], (1, num_filters), jnp.float32)
    p["be1"] = 0.05 * jax.random.normal(ks[3], (1, num_filters), jnp.float32)
    p["rm1"] = jnp.zeros((1, num_filters), jnp.float32)
    p["rv1"] = jnp.ones((1, num_filters), jnp.float32)
    # head Linear(num_filters, 512)
    p["w1"] = 0.05 * jax.random.normal(ks[4], (num_filters, hidden), jnp.float32)
    p["bb1"] = 0.05 * jax.random.normal(ks[5], (1, hidden), jnp.float32)
    # head BatchNorm1d(num_filters) applied to 512-d activations (num_filters == 512)
    p["g2"] = jnp.ones((1, hidden), jnp.float32)
    p["be2"] = jnp.zeros((1, hidden), jnp.float32)
    p["rm2"] = jnp.zeros((1, hidden), jnp.float32)
    p["rv2"] = jnp.ones((1, hidden), jnp.float32)
    # head Linear(512, num_classes)
    p["w2"] = 0.05 * jax.random.normal(ks[6], (hidden, num_classes), jnp.float32)
    p["bb2"] = 0.05 * jax.random.normal(ks[7], (1, num_classes), jnp.float32)
    return p


if __name__ == "__main__":
    N, C, H, W = 2, 4, 16, 16
    NUM_FILTERS = 512          # must be 512 for the reference head to be shape-consistent
    NUM_CLASSES = 10

    key = jax.random.PRNGKey(0)
    kx, kp = jax.random.split(key)
    x = jax.random.normal(kx, (N, C, H, W), jnp.float32)
    params = init_params(kp, C, NUM_FILTERS, NUM_CLASSES)

    y = jax.block_until_ready(fine_tune_model_forward(x, params))
    assert y.shape == (N, NUM_CLASSES) and y.dtype == jnp.float32
    # TODO(synk): Dropout(0.5) is modelled as eval-mode identity (no RNG masking).
    print("KERNEL_OK")
</pallas_src>

<mosaic_0001>
module attributes {stable_mosaic.version = 11 : i64} {
  func.func @fused_kernel(%arg0: i32, %arg1: memref<512x128xbf16, #tpu.memory_space<vmem>>, %arg2: memref<128x512xbf16, #tpu.memory_space<vmem>>, %arg3: memref<1x512xf32, #tpu.memory_space<vmem>>, %arg4: memref<8x512xbf16, #tpu.memory_space<vmem>>, %arg5: memref<512x512xbf16, #tpu.memory_space<vmem>>, %arg6: memref<1x512xf32, #tpu.memory_space<vmem>>, %arg7: memref<512x128xbf16, #tpu.memory_space<vmem>>, %arg8: memref<1x128xf32, #tpu.memory_space<vmem>>, %arg9: memref<8x128xf32, #tpu.memory_space<vmem>>) attributes {dimension_semantics = [#tpu.dimension_semantics<arbitrary>], iteration_bounds = array<i64: 1>, scalar_prefetch = 0 : i64, scratch_operands = 0 : i64, tpu.core_type = #tpu.core_type<tc>, window_params = [{pipeline_mode = #tpu.pipeline_mode<synchronous>, transform_indices = @transform_0, window_bounds = array<i64: 512, 128>}, {pipeline_mode = #tpu.pipeline_mode<synchronous>, transform_indices = @transform_1, window_bounds = array<i64: 128, 512>}, {pipeline_mode = #tpu.pipeline_mode<synchronous>, transform_indices = @transform_2, window_bounds = array<i64: 1, 512>}, {pipeline_mode = #tpu.pipeline_mode<synchronous>, transform_indices = @transform_3, window_bounds = array<i64: 8, 512>}, {pipeline_mode = #tpu.pipeline_mode<synchronous>, transform_indices = @transform_4, window_bounds = array<i64: 512, 512>}, {pipeline_mode = #tpu.pipeline_mode<synchronous>, transform_indices = @transform_5, window_bounds = array<i64: 1, 512>}, {pipeline_mode = #tpu.pipeline_mode<synchronous>, transform_indices = @transform_6, window_bounds = array<i64: 512, 128>}, {pipeline_mode = #tpu.pipeline_mode<synchronous>, transform_indices = @transform_7, window_bounds = array<i64: 1, 128>}, {pipeline_mode = #tpu.pipeline_mode<synchronous>, transform_indices = @transform_8, window_bounds = array<i64: 8, 128>}]} {
    %c0 = arith.constant 0 : index
    %c0_0 = arith.constant 0 : index
    %0 = vector.load %arg1[%c0, %c0_0] : memref<512x128xbf16, #tpu.memory_space<vmem>>, vector<512x128xbf16>
    %c0_1 = arith.constant 0 : index
    %c0_2 = arith.constant 0 : index
    %1 = vector.load %arg2[%c0_1, %c0_2] : memref<128x512xbf16, #tpu.memory_space<vmem>>, vector<128x512xbf16>
    %cst = arith.constant dense<0.000000e+00> : vector<512x512xf32>
    %2 = tpu.matmul %0, %1, %cst {dimension_numbers = #tpu.dot_dimension_numbers<[1], [0], [0], [1], [0, 0, 1, 1], [], []>} : vector<512x128xbf16>, vector<128x512xbf16>, vector<512x512xf32> -> vector<512x512xf32>
    %c0_3 = arith.constant 0 : index
    %c0_4 = arith.constant 0 : index
    %3 = vector.load %arg3[%c0_3, %c0_4] : memref<1x512xf32, #tpu.memory_space<vmem>>, vector<1x512xf32>
    %4 = vector.broadcast %3 : vector<1x512xf32> to vector<512x512xf32>
    %5 = arith.addf %2, %4 : vector<512x512xf32>
    %cst_5 = arith.constant 0.000000e+00 : f32
    %6 = vector.broadcast %cst_5 : f32 to vector<512x512xf32>
    %7 = arith.maximumf %5, %6 : vector<512x512xf32>
    %c0_6 = arith.constant 0 : index
    %c0_7 = arith.constant 0 : index
    %8 = vector.load %arg4[%c0_6, %c0_7] : memref<8x512xbf16, #tpu.memory_space<vmem>>, vector<8x512xbf16>
    %9 = arith.truncf %7 : vector<512x512xf32> to vector<512x512xbf16>
    %cst_8 = arith.constant dense<0.000000e+00> : vector<8x512xf32>
    %10 = tpu.matmul %8, %9, %cst_8 {dimension_numbers = #tpu.dot_dimension_numbers<[1], [0], [0], [1], [0, 0, 1, 1], [], []>} : vector<8x512xbf16>, vector<512x512xbf16>, vector<8x512xf32> -> vector<8x512xf32>
    %11 = arith.truncf %10 : vector<8x512xf32> to vector<8x512xbf16>
    %c0_9 = arith.constant 0 : index
    %c0_10 = arith.constant 0 : index
    %12 = vector.load %arg5[%c0_9, %c0_10] : memref<512x512xbf16, #tpu.memory_space<vmem>>, vector<512x512xbf16>
    %cst_11 = arith.constant dense<0.000000e+00> : vector<8x512xf32>
    %13 = tpu.matmul %11, %12, %cst_11 {dimension_numbers = #tpu.dot_dimension_numbers<[1], [0], [0], [1], [0, 0, 1, 1], [], []>} : vector<8x512xbf16>, vector<512x512xbf16>, vector<8x512xf32> -> vector<8x512xf32>
    %c0_12 = arith.constant 0 : index
    %c0_13 = arith.constant 0 : index
    %14 = vector.load %arg6[%c0_12, %c0_13] : memref<1x512xf32, #tpu.memory_space<vmem>>, vector<1x512xf32>
    %15 = vector.broadcast %14 : vector<1x512xf32> to vector<8x512xf32>
    %16 = arith.addf %13, %15 : vector<8x512xf32>
    %cst_14 = arith.constant 0.000000e+00 : f32
    %17 = vector.broadcast %cst_14 : f32 to vector<8x512xf32>
    %18 = arith.maximumf %16, %17 : vector<8x512xf32>
    %19 = arith.truncf %18 : vector<8x512xf32> to vector<8x512xbf16>
    %c0_15 = arith.constant 0 : index
    %c0_16 = arith.constant 0 : index
    %20 = vector.load %arg7[%c0_15, %c0_16] : memref<512x128xbf16, #tpu.memory_space<vmem>>, vector<512x128xbf16>
    %cst_17 = arith.constant dense<0.000000e+00> : vector<8x128xf32>
    %21 = tpu.matmul %19, %20, %cst_17 {dimension_numbers = #tpu.dot_dimension_numbers<[1], [0], [0], [1], [0, 0, 1, 1], [], []>} : vector<8x512xbf16>, vector<512x128xbf16>, vector<8x128xf32> -> vector<8x128xf32>
    %c0_18 = arith.constant 0 : index
    %c0_19 = arith.constant 0 : index
    %22 = vector.load %arg8[%c0_18, %c0_19] : memref<1x128xf32, #tpu.memory_space<vmem>>, vector<1x128xf32>
    %23 = vector.broadcast %22 : vector<1x128xf32> to vector<8x128xf32>
    %24 = arith.addf %21, %23 : vector<8x128xf32>
    %c0_20 = arith.constant 0 : index
    %c0_21 = arith.constant 0 : index
    %25 = vector.load %arg9[%c0_20, %c0_21] : memref<8x128xf32, #tpu.memory_space<vmem>>, vector<8x128xf32>
    tpu.vector_store %arg9[%c0_20, %c0_21], %24 {strides = array<i32>} : memref<8x128xf32, #tpu.memory_space<vmem>>, vector<8x128xf32>,
    return
  }
  func.func @transform_0(%arg0: i32) -> (i32, i32) {
    %c0_i32 = arith.constant 0 : i32
    %c0_i32_0 = arith.constant 0 : i32
    %c0_i32_1 = arith.constant 0 : i32
    return %c0_i32, %c0_i32_0 : i32, i32
  }
  func.func @transform_1(%arg0: i32) -> (i32, i32) {
    %c0_i32 = arith.constant 0 : i32
    %c0_i32_0 = arith.constant 0 : i32
    %c0_i32_1 = arith.constant 0 : i32
    return %c0_i32, %c0_i32_0 : i32, i32
  }
  func.func @transform_2(%arg0: i32) -> (i32, i32) {
    %c0_i32 = arith.constant 0 : i32
    %c0_i32_0 = arith.constant 0 : i32
    %c0_i32_1 = arith.constant 0 : i32
    return %c0_i32, %c0_i32_0 : i32, i32
  }
  func.func @transform_3(%arg0: i32) -> (i32, i32) {
    %c0_i32 = arith.constant 0 : i32
    %c0_i32_0 = arith.constant 0 : i32
    %c0_i32_1 = arith.constant 0 : i32
    return %c0_i32, %c0_i32_0 : i32, i32
  }
  func.func @transform_4(%arg0: i32) -> (i32, i32) {
    %c0_i32 = arith.constant 0 : i32
    %c0_i32_0 = arith.constant 0 : i32
    %c0_i32_1 = arith.constant 0 : i32
    return %c0_i32, %c0_i32_0 : i32, i32
  }
  func.func @transform_5(%arg0: i32) -> (i32, i32) {
    %c0_i32 = arith.constant 0 : i32
    %c0_i32_0 = arith.constant 0 : i32
    %c0_i32_1 = arith.constant 0 : i32
    return %c0_i32, %c0_i32_0 : i32, i32
  }
  func.func @transform_6(%arg0: i32) -> (i32, i32) {
    %c0_i32 = arith.constant 0 : i32
    %c0_i32_0 = arith.constant 0 : i32
    %c0_i32_1 = arith.constant 0 : i32
    return %c0_i32, %c0_i32_0 : i32, i32
  }
  func.func @transform_7(%arg0: i32) -> (i32, i32) {
    %c0_i32 = arith.constant 0 : i32
    %c0_i32_0 = arith.constant 0 : i32
    %c0_i32_1 = arith.constant 0 : i32
    return %c0_i32, %c0_i32_0 : i32, i32
  }
  func.func @transform_8(%arg0: i32) -> (i32, i32) {
    %c0_i32 = arith.constant 0 : i32
    %c0_i32_0 = arith.constant 0 : i32
    %c0_i32_1 = arith.constant 0 : i32
    return %c0_i32, %c0_i32_0 : i32, i32
  }
}

</mosaic_0001>

<llo_original>
// kernel: fine_tune_model_forward.1
$region0: #{fine_tune_model_forward.1}
  #allocation0 [shape = 'u32[]', space=smem, size = 0x4, offset = 0x4, fixed_abs, tag = 'smem constant byte address 0x4 - core index']
  #allocation1 [shape = 'u32[144,128]{1,0:T(1,128)}', space=vmem, size = 0x12000, scoped, tag = 'internal scratch']
  %s0 = inlined_call_operand.vmem [shape: bf16[512,128], index: 0, kind: input, shape index: {}]
  %s1 = inlined_call_operand.vmem [shape: bf16[128,512], index: 1, kind: input, shape index: {}]
  %s2 = inlined_call_operand.vmem [shape: f32[1,512], index: 2, kind: input, shape index: {}]
  %s3 = inlined_call_operand.vmem [shape: bf16[8,512], index: 3, kind: input, shape index: {}]
  %s4 = inlined_call_operand.vmem [shape: bf16[512,512], index: 4, kind: input, shape index: {}]
  %s5 = inlined_call_operand.vmem [shape: f32[1,512], index: 5, kind: input, shape index: {}]
  %s6 = inlined_call_operand.vmem [shape: bf16[512,128], index: 6, kind: input, shape index: {}]
  %s7 = inlined_call_operand.vmem [shape: f32[1,128], index: 7, kind: input, shape index: {}]
  %s8 = inlined_call_operand.vmem [shape: f32[8,128], index: 8, kind: output, shape index: {}]
  %s9 = sld [smem:[#allocation0]]
  $region42: #{fine_tune_model_forward.1} parent=0
    _
  %s11 = ssub.s32 1, %s9
  %s12 = scalar_select 0, %s11, %s9
  // Predicated region
  $region2: #{fine_tune_model_forward.1} parent=0 // pred_check
    _
  $region3: #{fine_tune_model_forward.1} parent=0 // pred_check_branch
    %14 = sbr.rel (0) target = $region5
  $region4: #{fine_tune_model_forward.1} parent=0 // pred_region
    _
  $region5: #{fine_tune_model_forward.1} parent=0 // pred_fallthru
    _
  // Predicated region
  $region6: #{fine_tune_model_forward.1} parent=0 // pred_check
    _
  $region7: #{fine_tune_model_forward.1} parent=0 // pred_check_branch
    %16 = sbr.rel (0) target = $region9
  $region8: #{fine_tune_model_forward.1} parent=0 // pred_region
    _
  $region9: #{fine_tune_model_forward.1} parent=0 // pred_fallthru
    _
  // Predicated region
  $region10: #{fine_tune_model_forward.1} parent=0 // pred_check
    _
  $region11: #{fine_tune_model_forward.1} parent=0 // pred_check_branch
    %18 = sbr.rel (0) target = $region13
  $region12: #{fine_tune_model_forward.1} parent=0 // pred_region
    _
  $region13: #{fine_tune_model_forward.1} parent=0 // pred_fallthru
    _
  // Predicated region
  $region14: #{fine_tune_model_forward.1} parent=0 // pred_check
    _
  $region15: #{fine_tune_model_forward.1} parent=0 // pred_check_branch
    %20 = sbr.rel (0) target = $region17
  $region16: #{fine_tune_model_forward.1} parent=0 // pred_region
    _
  $region17: #{fine_tune_model_forward.1} parent=0 // pred_fallthru
    _
  // Predicated region
  $region18: #{fine_tune_model_forward.1} parent=0 // pred_check
    _
  $region19: #{fine_tune_model_forward.1} parent=0 // pred_check_branch
    %22 = sbr.rel (0) target = $region21
  $region20: #{fine_tune_model_forward.1} parent=0 // pred_region
    _
  $region21: #{fine_tune_model_forward.1} parent=0 // pred_fallthru
    _
  // Predicated region
  $region22: #{fine_tune_model_forward.1} parent=0 // pred_check
    _
  $region23: #{fine_tune_model_forward.1} parent=0 // pred_check_branch
    %24 = sbr.rel (0) target = $region25
  $region24: #{fine_tune_model_forward.1} parent=0 // pred_region
    _
  $region25: #{fine_tune_model_forward.1} parent=0 // pred_fallthru
    _
  // Predicated region
  $region26: #{fine_tune_model_forward.1} parent=0 // pred_check
    _
  $region27: #{fine_tune_model_forward.1} parent=0 // pred_check_branch
    %26 = sbr.rel (0) target = $region29
  $region28: #{fine_tune_model_forward.1} parent=0 // pred_region
    _
  $region29: #{fine_tune_model_forward.1} parent=0 // pred_fallthru
    _
  // Predicated region
  $region30: #{fine_tune_model_forward.1} parent=0 // pred_check
    _
  $region31: #{fine_tune_model_forward.1} parent=0 // pred_check_branch
    %28 = sbr.rel (0) target = $region33
  $region32: #{fine_tune_model_forward.1} parent=0 // pred_region
    _
  $region33: #{fine_tune_model_forward.1} parent=0 // pred_fallthru
    _
  %v30 = vld [vmem:[%s0] sm:$0xf]
  %v31 = vld [vmem:[%s0 + $0x4] sm:$0xf]
  %v32 = vld [vmem:[%s0 + $0x8] sm:$0xf]
  %v33 = vld [vmem:[%s0 + $0xc] sm:$0xf]
  %v34 = vld [vmem:[%s0 + $0x10] sm:$0xf]
  %v35 = vld [vmem:[%s0 + $0x14] sm:$0xf]
  %v36 = vld [vmem:[%s0 + $0x18] sm:$0xf]
  %v37 = vld [vmem:[%s0 + $0x1c] sm:$0xf]
  %v38 = vld [vmem:[%s0 + $0x20] sm:$0xf]
  %v39 = vld [vmem:[%s0 + $0x24] sm:$0xf]
  %v40 = vld [vmem:[%s0 + $0x28] sm:$0xf]
  %v41 = vld [vmem:[%s0 + $0x2c] sm:$0xf]
  %v42 = vld [vmem:[%s0 + $0x30] sm:$0xf]
  %v43 = vld [vmem:[%s0 + $0x34] sm:$0xf]
  %v44 = vld [vmem:[%s0 + $0x38] sm:$0xf]
  %v45 = vld [vmem:[%s0 + $0x3c] sm:$0xf]
  %v46 = vld [vmem:[%s0 + $0x40] sm:$0xf]
  %v47 = vld [vmem:[%s0 + $0x44] sm:$0xf]
  %v48 = vld [vmem:[%s0 + $0x48] sm:$0xf]
  %v49 = vld [vmem:[%s0 + $0x4c] sm:$0xf]
  %v50 = vld [vmem:[%s0 + $0x50] sm:$0xf]
  %v51 = vld [vmem:[%s0 + $0x54] sm:$0xf]
  %v52 = vld [vmem:[%s0 + $0x58] sm:$0xf]
  %v53 = vld [vmem:[%s0 + $0x5c] sm:$0xf]
  %v54 = vld [vmem:[%s0 + $0x60] sm:$0xf]
  %v55 = vld [vmem:[%s0 + $0x64] sm:$0xf]
  %v56 = vld [vmem:[%s0 + $0x68] sm:$0xf]
  %v57 = vld [vmem:[%s0 + $0x6c] sm:$0xf]
  %v58 = vld [vmem:[%s0 + $0x70] sm:$0xf]
  %v59 = vld [vmem:[%s0 + $0x74] sm:$0xf]
  %v60 = vld [vmem:[%s0 + $0x78] sm:$0xf]
  %v61 = vld [vmem:[%s0 + $0x7c] sm:$0xf]
  %v62 = vld [vmem:[%s0 + $0x80] sm:$0xf]
  %v63 = vld [vmem:[%s0 + $0x84] sm:$0xf]
  %v64 = vld [vmem:[%s0 + $0x88] sm:$0xf]
  %v65 = vld [vmem:[%s0 + $0x8c] sm:$0xf]
  %v66 = vld [vmem:[%s0 + $0x90] sm:$0xf]
  %v67 = vld [vmem:[%s0 + $0x94] sm:$0xf]
  %v68 = vld [vmem:[%s0 + $0x98] sm:$0xf]
  %v69 = vld [vmem:[%s0 + $0x9c] sm:$0xf]
  %v70 = vld [vmem:[%s0 + $0xa0] sm:$0xf]
  %v71 = vld [vmem:[%s0 + $0xa4] sm:$0xf]
  %v72 = vld [vmem:[%s0 + $0xa8] sm:$0xf]
  %v73 = vld [vmem:[%s0 + $0xac] sm:$0xf]
  %v74 = vld [vmem:[%s0 + $0xb0] sm:$0xf]
  %v75 = vld [vmem:[%s0 + $0xb4] sm:$0xf]
  %v76 = vld [vmem:[%s0 + $0xb8] sm:$0xf]
  %v77 = vld [vmem:[%s0 + $0xbc] sm:$0xf]
  %v78 = vld [vmem:[%s0 + $0xc0] sm:$0xf]
  %v79 = vld [vmem:[%s0 + $0xc4] sm:$0xf]
  %v80 = vld [vmem:[%s0 + $0xc8] sm:$0xf]
  %v81 = vld [vmem:[%s0 + $0xcc] sm:$0xf]
  %v82 = vld [vmem:[%s0 + $0xd0] sm:$0xf]
  %v83 = vld [vmem:[%s0 + $0xd4] sm:$0xf]
  %v84 = vld [vmem:[%s0 + $0xd8] sm:$0xf]
  %v85 = vld [vmem:[%s0 + $0xdc] sm:$0xf]
  %v86 = vld [vmem:[%s0 + $0xe0] sm:$0xf]
  %v87 = vld [vmem:[%s0 + $0xe4] sm:$0xf]
  %v88 = vld [vmem:[%s0 + $0xe8] sm:$0xf]
  %v89 = vld [vmem:[%s0 + $0xec] sm:$0xf]
  %v90 = vld [vmem:[%s0 + $0xf0] sm:$0xf]
  %v91 = vld [vmem:[%s0 + $0xf4] sm:$0xf]
  %v92 = vld [vmem:[%s0 + $0xf8] sm:$0xf]
  %v93 = vld [vmem:[%s0 + $0xfc] sm:$0xf]
  %v94 = vld [vmem:[%s1] sm:$0xff]
  %v95 = vld [vmem:[%s1 + $0x8] sm:$0xff]
  %v96 = vld [vmem:[%s1 + $0x10] sm:$0xff]
  %v97 = vld [vmem:[%s1 + $0x18] sm:$0xff]
  %v98 = vld [vmem:[%s1 + $0x20] sm:$0xff]
  %v99 = vld [vmem:[%s1 + $0x28] sm:$0xff]
  %v100 = vld [vmem:[%s1 + $0x30] sm:$0xff]
  %v101 = vld [vmem:[%s1 + $0x38] sm:$0xff]
  %v102 = vld [vmem:[%s1 + $0x40] sm:$0xff]
  %v103 = vld [vmem:[%s1 + $0x48] sm:$0xff]
  %v104 = vld [vmem:[%s1 + $0x50] sm:$0xff]
  %v105 = vld [vmem:[%s1 + $0x58] sm:$0xff]
  %v106 = vld [vmem:[%s1 + $0x60] sm:$0xff]
  %v107 = vld [vmem:[%s1 + $0x68] sm:$0xff]
  %v108 = vld [vmem:[%s1 + $0x70] sm:$0xff]
  %v109 = vld [vmem:[%s1 + $0x78] sm:$0xff]
  %v110 = vld [vmem:[%s1 + $0x80] sm:$0xff]
  %v111 = vld [vmem:[%s1 + $0x88] sm:$0xff]
  %v112 = vld [vmem:[%s1 + $0x90] sm:$0xff]
  %v113 = vld [vmem:[%s1 + $0x98] sm:$0xff]
  %v114 = vld [vmem:[%s1 + $0xa0] sm:$0xff]
  %v115 = vld [vmem:[%s1 + $0xa8] sm:$0xff]
  %v116 = vld [vmem:[%s1 + $0xb0] sm:$0xff]
  %v117 = vld [vmem:[%s1 + $0xb8] sm:$0xff]
  %v118 = vld [vmem:[%s1 + $0xc0] sm:$0xff]
  %v119 = vld [vmem:[%s1 + $0xc8] sm:$0xff]
  %v120 = vld [vmem:[%s1 + $0xd0] sm:$0xff]
  %v121 = vld [vmem:[%s1 + $0xd8] sm:$0xff]
  %v122 = vld [vmem:[%s1 + $0xe0] sm:$0xff]
  %v123 = vld [vmem:[%s1 + $0xe8] sm:$0xff]
  %v124 = vld [vmem:[%s1 + $0xf0] sm:$0xff]
  %v125 = vld [vmem:[%s1 + $0xf8] sm:$0xff]
  %v126 = vld [vmem:[%s2] sm:$0xf]
  %v128 = vlaneseq
  %v129 = vshrl.u32 %v128, 7
  %v130 = vsub.s32 0, %v129
  %v131 = vrot.slane %v126, %v130
  %v132 = vlaneseq
  %v133 = vshrl.u32 %v132, 7
  %v134 = vsub.s32 1, %v133
  %v135 = vrot.slane %v126, %v134
  %v136 = vlaneseq
  %v137 = vshrl.u32 %v136, 7
  %v138 = vsub.s32 2, %v137
  %v139 = vrot.slane %v126, %v138
  %v140 = vlaneseq
  %v141 = vshrl.u32 %v140, 7
  %v142 = vsub.s32 3, %v141
  %v143 = vrot.slane %v126, %v142
  %v212 = vunpack.c.l.b16 %v30
  %v213 = vunpack.c.l.b16 %v31
  %v214 = vunpack.c.l.b16 %v32
  %v215 = vunpack.c.l.b16 %v33
  %v216 = vunpack.c.l.b16 %v34
  %v217 = vunpack.c.l.b16 %v35
  %v218 = vunpack.c.l.b16 %v36
  %v219 = vunpack.c.l.b16 %v37
  %v220 = vunpack.c.l.b16 %v38
  %v221 = vunpack.c.l.b16 %v39
  %v222 = vunpack.c.l.b16 %v40
  %v223 = vunpack.c.l.b16 %v41
  %v224 = vunpack.c.l.b16 %v42
  %v225 = vunpack.c.l.b16 %v43
  %v226 = vunpack.c.l.b16 %v44
  %v227 = vunpack.c.l.b16 %v45
  %v228 = vunpack.c.l.b16 %v46
  %v229 = vunpack.c.l.b16 %v47
  %v230 = vunpack.c.l.b16 %v48
  %v231 = vunpack.c.l.b16 %v49
  %v232 = vunpack.c.l.b16 %v50
  %v233 = vunpack.c.l.b16 %v51
  %v234 = vunpack.c.l.b16 %v52
  %v235 = vunpack.c.l.b16 %v53
  %v236 = vunpack.c.l.b16 %v54
  %v237 = vunpack.c.l.b16 %v55
  %v238 = vunpack.c.l.b16 %v56
  %v239 = vunpack.c.l.b16 %v57
  %v240 = vunpack.c.l.b16 %v58
  %v241 = vunpack.c.l.b16 %v59
  %v242 = vunpack.c.l.b16 %v60
  %v243 = vunpack.c.l.b16 %v61
  %v244 = vunpack.c.l.b16 %v62
  %v245 = vunpack.c.l.b16 %v63
  %v246 = vunpack.c.l.b16 %v64
  %v247 = vunpack.c.l.b16 %v65
  %v248 = vunpack.c.l.b16 %v66
  %v249 = vunpack.c.l.b16 %v67
  %v250 = vunpack.c.l.b16 %v68
  %v251 = vunpack.c.l.b16 %v69
  %v252 = vunpack.c.l.b16 %v70
  %v253 = vunpack.c.l.b16 %v71
  %v254 = vunpack.c.l.b16 %v72
  %v255 = vunpack.c.l.b16 %v73
  %v256 = vunpack.c.l.b16 %v74
  %v257 = vunpack.c.l.b16 %v75
  %v258 = vunpack.c.l.b16 %v76
  %v259 = vunpack.c.l.b16 %v77
  %v260 = vunpack.c.l.b16 %v78
  %v261 = vunpack.c.l.b16 %v79
  %v262 = vunpack.c.l.b16 %v80
  %v263 = vunpack.c.l.b16 %v81
  %v264 = vunpack.c.l.b16 %v82
  %v265 = vunpack.c.l.b16 %v83
  %v266 = vunpack.c.l.b16 %v84
  %v267 = vunpack.c.l.b16 %v85
  %v268 = vunpack.c.l.b16 %v86
  %v269 = vunpack.c.l.b16 %v87
  %v270 = vunpack.c.l.b16 %v88
  %v271 = vunpack.c.l.b16 %v89
  %v272 = vunpack.c.l.b16 %v90
  %v273 = vunpack.c.l.b16 %v91
  %v274 = vunpack.c.l.b16 %v92
  %v275 = vunpack.c.l.b16 %v93
  %v276 = vpack.c.b16 %v213, %v212
  %v277 = vpack.c.b16 %v215, %v214
  %v278 = vpack.c.b16 %v217, %v216
  %v279 = vpack.c.b16 %v219, %v218
  %v280 = vpack.c.b16 %v221, %v220
  %v281 = vpack.c.b16 %v223, %v222
  %v282 = vpack.c.b16 %v225, %v224
  %v283 = vpack.c.b16 %v227, %v226
  %v284 = vpack.c.b16 %v229, %v228
  %v285 = vpack.c.b16 %v231, %v230
  %v286 = vpack.c.b16 %v233, %v232
  %v287 = vpack.c.b16 %v235, %v234
  %v288 = vpack.c.b16 %v237, %v236
  %v289 = vpack.c.b16 %v239, %v238
  %v290 = vpack.c.b16 %v241, %v240
  %v291 = vpack.c.b16 %v243, %v242
  %v292 = vpack.c.b16 %v245, %v244
  %v293 = vpack.c.b16 %v247, %v246
  %v294 = vpack.c.b16 %v249, %v248
  %v295 = vpack.c.b16 %v251, %v250
  %v296 = vpack.c.b16 %v253, %v252
  %v297 = vpack.c.b16 %v255, %v254
  %v298 = vpack.c.b16 %v257, %v256
  %v299 = vpack.c.b16 %v259, %v258
  %v300 = vpack.c.b16 %v261, %v260
  %v301 = vpack.c.b16 %v263, %v262
  %v302 = vpack.c.b16 %v265, %v264
  %v303 = vpack.c.b16 %v267, %v266
  %v304 = vpack.c.b16 %v269, %v268
  %v305 = vpack.c.b16 %v271, %v270
  %v306 = vpack.c.b16 %v273, %v272
  %v307 = vpack.c.b16 %v275, %v274
  %v372 = vunpack.c.l.b16 %v94
  %v373 = vunpack.c.h.b16 %v94
  %v374 = vunpack.c.l.b16 %v95
  %v375 = vunpack.c.h.b16 %v95
  %v376 = vunpack.c.l.b16 %v96
  %v377 = vunpack.c.h.b16 %v96
  %v378 = vunpack.c.l.b16 %v97
  %v379 = vunpack.c.h.b16 %v97
  %v380 = vunpack.c.l.b16 %v98
  %v381 = vunpack.c.h.b16 %v98
  %v382 = vunpack.c.l.b16 %v99
  %v383 = vunpack.c.h.b16 %v99
  %v384 = vunpack.c.l.b16 %v100
  %v385 = vunpack.c.h.b16 %v100
  %v386 = vunpack.c.l.b16 %v101
  %v387 = vunpack.c.h.b16 %v101
  %v388 = vunpack.c.l.b16 %v102
  %v389 = vunpack.c.h.b16 %v102
  %v390 = vunpack.c.l.b16 %v103
  %v391 = vunpack.c.h.b16 %v103
  %v392 = vunpack.c.l.b16 %v104
  %v393 = vunpack.c.h.b16 %v104
  %v394 = vunpack.c.l.b16 %v105
  %v395 = vunpack.c.h.b16 %v105
  %v396 = vunpack.c.l.b16 %v106
  %v397 = vunpack.c.h.b16 %v106
  %v398 = vunpack.c.l.b16 %v107
  %v399 = vunpack.c.h.b16 %v107
  %v400 = vunpack.c.l.b16 %v108
  %v401 = vunpack.c.h.b16 %v108
  %v402 = vunpack.c.l.b16 %v109
  %v403 = vunpack.c.h.b16 %v109
  %v404 = vunpack.c.l.b16 %v110
  %v405 = vunpack.c.h.b16 %v110
  %v406 = vunpack.c.l.b16 %v111
  %v407 = vunpack.c.h.b16 %v111
  %v408 = vunpack.c.l.b16 %v112
  %v409 = vunpack.c.h.b16 %v112
  %v410 = vunpack.c.l.b16 %v113
  %v411 = vunpack.c.h.b16 %v113
  %v412 = vunpack.c.l.b16 %v114
  %v413 = vunpack.c.h.b16 %v114
  %v414 = vunpack.c.l.b16 %v115
  %v415 = vunpack.c.h.b16 %v115
  %v416 = vunpack.c.l.b16 %v116
  %v417 = vunpack.c.h.b16 %v116
  %v418 = vunpack.c.l.b16 %v117
  %v419 = vunpack.c.h.b16 %v117
  %v420 = vunpack.c.l.b16 %v118
  %v421 = vunpack.c.h.b16 %v118
  %v422 = vunpack.c.l.b16 %v119
  %v423 = vunpack.c.h.b16 %v119
  %v424 = vunpack.c.l.b16 %v120
  %v425 = vunpack.c.h.b16 %v120
  %v426 = vunpack.c.l.b16 %v121
  %v427 = vunpack.c.h.b16 %v121
  %v428 = vunpack.c.l.b16 %v122
  %v429 = vunpack.c.h.b16 %v122
  %v430 = vunpack.c.l.b16 %v123
  %v431 = vunpack.c.h.b16 %v123
  %v432 = vunpack.c.l.b16 %v124
  %v433 = vunpack.c.h.b16 %v124
  %v434 = vunpack.c.l.b16 %v125
  %v435 = vunpack.c.h.b16 %v125
  %v436 = vpack.c.b16 %v376, %v372
  %v437 = vpack.c.b16 %v377, %v373
  %v438 = vpack.c.b16 %v378, %v374
  %v439 = vpack.c.b16 %v379, %v375
  %v440 = vpack.c.b16 %v384, %v380
  %v441 = vpack.c.b16 %v385, %v381
  %v442 = vpack.c.b16 %v386, %v382
  %v443 = vpack.c.b16 %v387, %v383
  %v444 = vpack.c.b16 %v392, %v388
  %v445 = vpack.c.b16 %v393, %v389
  %v446 = vpack.c.b16 %v394, %v390
  %v447 = vpack.c.b16 %v395, %v391
  %v448 = vpack.c.b16 %v400, %v396
  %v449 = vpack.c.b16 %v401, %v397
  %v450 = vpack.c.b16 %v402, %v398
  %v451 = vpack.c.b16 %v403, %v399
  %v452 = vpack.c.b16 %v408, %v404
  %v453 = vpack.c.b16 %v409, %v405
  %v454 = vpack.c.b16 %v410, %v406
  %v455 = vpack.c.b16 %v411, %v407
  %v456 = vpack.c.b16 %v416, %v412
  %v457 = vpack.c.b16 %v417, %v413
  %v458 = vpack.c.b16 %v418, %v414
  %v459 = vpack.c.b16 %v419, %v415
  %v460 = vpack.c.b16 %v424, %v420
  %v461 = vpack.c.b16 %v425, %v421
  %v462 = vpack.c.b16 %v426, %v422
  %v463 = vpack.c.b16 %v427, %v423
  %v464 = vpack.c.b16 %v432, %v428
  %v465 = vpack.c.b16 %v433, %v429
  %v466 = vpack.c.b16 %v434, %v430
  %v467 = vpack.c.b16 %v435, %v431
  %500 = vmatprep.subr.bf16.mxu0 %v437
  %501 = vmatpush1.bf16.msra.mxu0 %v436
  %502 = vmatprep.subr.bf16.mxu0 %v441
  %503 = vmatpush1.bf16.msra.mxu0 %v440
  %504 = vmatprep.subr.bf16.mxu0 %v445
  %505 = vmatpush1.bf16.msra.mxu0 %v444
  %506 = vmatprep.subr.bf16.mxu0 %v449
  %507 = vmatpush1.bf16.msra.mxu0 %v448
  %508 = vmatprep.subr.bf16.mxu0 %v453
  %509 = vmatpush1.bf16.msra.mxu0 %v452
  %510 = vmatprep.subr.bf16.mxu0 %v457
  %511 = vmatpush1.bf16.msra.mxu0 %v456
  %512 = vmatprep.subr.bf16.mxu0 %v461
  %513 = vmatpush1.bf16.msra.mxu0 %v460
  %514 = vmatprep.subr.bf16.mxu0 %v465
  %515 = vmatpush1.bf16.msra.mxu0 %v464
  %516 = vmatprep.subr.bf16.mxu0 0
  %517 = vmatpush1.bf16.msra.mxu0 0
  %518 = vmatprep.subr.bf16.mxu0 0
  %519 = vmatpush1.bf16.msra.mxu0 0
  %520 = vmatprep.subr.bf16.mxu0 0
  %521 = vmatpush1.bf16.msra.mxu0 0
  %522 = vmatprep.subr.bf16.mxu0 0
  %523 = vmatpush1.bf16.msra.mxu0 0
  %524 = vmatprep.subr.bf16.mxu0 0
  %525 = vmatpush1.bf16.msra.mxu0 0
  %526 = vmatprep.subr.bf16.mxu0 0
  %527 = vmatpush1.bf16.msra.mxu0 0
  %528 = vmatprep.subr.bf16.mxu0 0
  %529 = vmatpush1.bf16.msra.mxu0 0
  %530 = vmatprep.subr.bf16.mxu0 0
  %531 = vmatpush1.bf16.msra.mxu0 0
  %532 = vmatprep.mubr.bf16.mxu0 0
  %533 = vmatmul.mubr.bf16.gmra.mrb[0].mxu0 %v276
  %v534 = vpop.f32.mrb[0].mxu0
  %v535 = vadd.f32 %v131, %v534
  %v536 = vpop.f32.mrb[0].mxu0
  %v537 = vadd.f32 %v135, %v536
  %v538 = vpop.f32.mrb[0].mxu0
  %v539 = vadd.f32 %v131, %v538
  %v540 = vpop.f32.mrb[0].mxu0
  %v541 = vadd.f32 %v135, %v540
  %542 = vmatprep.mubr.bf16.mxu0 0
  %543 = vmatmul.mubr.bf16.gmra.mrb[0].mxu0 %v277
  %v544 = vpop.f32.mrb[0].mxu0
  %v545 = vadd.f32 %v131, %v544
  %v546 = vpop.f32.mrb[0].mxu0
  %v547 = vadd.f32 %v135, %v546
  %v548 = vpop.f32.mrb[0].mxu0
  %v549 = vadd.f32 %v131, %v548
  %v550 = vpop.f32.mrb[0].mxu0
  %v551 = vadd.f32 %v135, %v550
  %552 = vmatprep.mubr.bf16.mxu0 0
  %553 = vmatmul.mubr.bf16.gmra.mrb[0].mxu0 %v278
  %v554 = vpop.f32.mrb[0].mxu0
  %v555 = vadd.f32 %v131, %v554
  %v556 = vpop.f32.mrb[0].mxu0
  %v557 = vadd.f32 %v135, %v556
  %v558 = vpop.f32.mrb[0].mxu0
  %v559 = vadd.f32 %v131, %v558
  %v560 = vpop.f32.mrb[0].mxu0
  %v561 = vadd.f32 %v135, %v560
  %562 = vmatprep.mubr.bf16.mxu0 0
  %563 = vmatmul.mubr.bf16.gmra.mrb[0].mxu0 %v279
  %v564 = vpop.f32.mrb[0].mxu0
  %v565 = vadd.f32 %v131, %v564
  %v566 = vpop.f32.mrb[0].mxu0
  %v567 = vadd.f32 %v135, %v566
  %v568 = vpop.f32.mrb[0].mxu0
  %v569 = vadd.f32 %v131, %v568
  %v570 = vpop.f32.mrb[0].mxu0
  %v571 = vadd.f32 %v135, %v570
  %572 = vmatprep.mubr.bf16.mxu0 0
  %573 = vmatmul.mubr.bf16.gmra.mrb[0].mxu0 %v280
  %v574 = vpop.f32.mrb[0].mxu0
  %v575 = vadd.f32 %v131, %v574
  %v576 = vpop.f32.mrb[0].mxu0
  %v577 = vadd.f32 %v135, %v576
  %v578 = vpop.f32.mrb[0].mxu0
  %v579 = vadd.f32 %v131, %v578
  %v580 = vpop.f32.mrb[0].mxu0
  %v581 = vadd.f32 %v135, %v580
  %582 = vmatprep.mubr.bf16.mxu0 0
  %583 = vmatmul.mubr.bf16.gmra.mrb[0].mxu0 %v281
  %v584 = vpop.f32.mrb[0].mxu0
  %v585 = vadd.f32 %v131, %v584
  %v586 = vpop.f32.mrb[0].mxu0
  %v587 = vadd.f32 %v135, %v586
  %v588 = vpop.f32.mrb[0].mxu0
  %v589 = vadd.f32 %v131, %v588
  %v590 = vpop.f32.mrb[0].mxu0
  %v591 = vadd.f32 %v135, %v590
  %592 = vmatprep.mubr.bf16.mxu0 0
  %593 = vmatmul.mubr.bf16.gmra.mrb[0].mxu0 %v282
  %v594 = vpop.f32.mrb[0].mxu0
  %v595 = vadd.f32 %v131, %v594
  %v596 = vpop.f32.mrb[0].mxu0
  %v597 = vadd.f32 %v135, %v596
  %v598 = vpop.f32.mrb[0].mxu0
  %v599 = vadd.f32 %v131, %v598
  %v600 = vpop.f32.mrb[0].mxu0
  %v601 = vadd.f32 %v135, %v600
  %602 = vmatprep.mubr.bf16.mxu0 0
  %603 = vmatmul.mubr.bf16.gmra.mrb[0].mxu0 %v283
  %v604 = vpop.f32.mrb[0].mxu0
  %v605 = vadd.f32 %v131, %v604
  %v606 = vpop.f32.mrb[0].mxu0
  %v607 = vadd.f32 %v135, %v606
  %v608 = vpop.f32.mrb[0].mxu0
  %v609 = vadd.f32 %v131, %v608
  %v610 = vpop.f32.mrb[0].mxu0
  %v611 = vadd.f32 %v135, %v610
  %612 = vmatprep.mubr.bf16.mxu0 0
  %613 = vmatmul.mubr.bf16.gmra.mrb[0].mxu0 %v284
  %v614 = vpop.f32.mrb[0].mxu0
  %v615 = vadd.f32 %v131, %v614
  %v616 = vpop.f32.mrb[0].mxu0
  %v617 = vadd.f32 %v135, %v616
  %v618 = vpop.f32.mrb[0].mxu0
  %v619 = vadd.f32 %v131, %v618
  %v620 = vpop.f32.mrb[0].mxu0
  %v621 = vadd.f32 %v135, %v620
  %622 = vmatprep.mubr.bf16.mxu0 0
  %623 = vmatmul.mubr.bf16.gmra.mrb[0].mxu0 %v285
  %v624 = vpop.f32.mrb[0].mxu0
  %v625 = vadd.f32 %v131, %v624
  %v626 = vpop.f32.mrb[0].mxu0
  %v627 = vadd.f32 %v135, %v626
  %v628 = vpop.f32.mrb[0].mxu0
  %v629 = vadd.f32 %v131, %v628
  %v630 = vpop.f32.mrb[0].mxu0
  %v631 = vadd.f32 %v135, %v630
  %632 = vmatprep.mubr.bf16.mxu0 0
  %633 = vmatmul.mubr.bf16.gmra.mrb[0].mxu0 %v286
  %v634 = vpop.f32.mrb[0].mxu0
  %v635 = vadd.f32 %v131, %v634
  %v636 = vpop.f32.mrb[0].mxu0
  %v637 = vadd.f32 %v135, %v636
  %v638 = vpop.f32.mrb[0].mxu0
  %v639 = vadd.f32 %v131, %v638
  %v640 = vpop.f32.mrb[0].mxu0
  %v641 = vadd.f32 %v135, %v640
  %642 = vmatprep.mubr.bf16.mxu0 0
  %643 = vmatmul.mubr.bf16.gmra.mrb[0].mxu0 %v287
  %v644 = vpop.f32.mrb[0].mxu0
  %v645 = vadd.f32 %v131, %v644
  %v646 = vpop.f32.mrb[0].mxu0
  %v647 = vadd.f32 %v135, %v646
  %v648 = vpop.f32.mrb[0].mxu0
  %v649 = vadd.f32 %v131, %v648
  %v650 = vpop.f32.mrb[0].mxu0
  %v651 = vadd.f32 %v135, %v650
  %652 = vmatprep.mubr.bf16.mxu0 0
  %653 = vmatmul.mubr.bf16.gmra.mrb[0].mxu0 %v288
  %v654 = vpop.f32.mrb[0].mxu0
  %v655 = vadd.f32 %v131, %v654
  %v656 = vpop.f32.mrb[0].mxu0
  %v657 = vadd.f32 %v135, %v656
  %v658 = vpop.f32.mrb[0].mxu0
  %v659 = vadd.f32 %v131, %v658
  %v660 = vpop.f32.mrb[0].mxu0
  %v661 = vadd.f32 %v135, %v660
  %662 = vmatprep.mubr.bf16.mxu0 0
  %663 = vmatmul.mubr.bf16.gmra.mrb[0].mxu0 %v289
  %v664 = vpop.f32.mrb[0].mxu0
  %v665 = vadd.f32 %v131, %v664
  %v666 = vpop.f32.mrb[0].mxu0
  %v667 = vadd.f32 %v135, %v666
  %v668 = vpop.f32.mrb[0].mxu0
  %v669 = vadd.f32 %v131, %v668
  %v670 = vpop.f32.mrb[0].mxu0
  %v671 = vadd.f32 %v135, %v670
  %672 = vmatprep.mubr.bf16.mxu0 0
  %673 = vmatmul.mubr.bf16.gmra.mrb[0].mxu0 %v290
  %v674 = vpop.f32.mrb[0].mxu0
  %v675 = vadd.f32 %v131, %v674
  %v676 = vpop.f32.mrb[0].mxu0
  %v677 = vadd.f32 %v135, %v676
  %v678 = vpop.f32.mrb[0].mxu0
  %v679 = vadd.f32 %v131, %v678
  %v680 = vpop.f32.mrb[0].mxu0
  %v681 = vadd.f32 %v135, %v680
  %682 = vmatprep.mubr.bf16.mxu0 0
  %683 = vmatmul.mubr.bf16.gmra.mrb[0].mxu0 %v291
  %v684 = vpop.f32.mrb[0].mxu0
  %v685 = vadd.f32 %v131, %v684
  %v686 = vpop.f32.mrb[0].mxu0
  %v687 = vadd.f32 %v135, %v686
  %v688 = vpop.f32.mrb[0].mxu0
  %v689 = vadd.f32 %v131, %v688
  %v690 = vpop.f32.mrb[0].mxu0
  %v691 = vadd.f32 %v135, %v690
  %692 = vmatprep.mubr.bf16.mxu0 0
  %693 = vmatmul.mubr.bf16.gmra.mrb[0].mxu0 %v292
  %v694 = vpop.f32.mrb[0].mxu0
  %v695 = vadd.f32 %v131, %v694
  %v696 = vpop.f32.mrb[0].mxu0
  %v697 = vadd.f32 %v135, %v696
  %v698 = vpop.f32.mrb[0].mxu0
  %v699 = vadd.f32 %v131, %v698
  %v700 = vpop.f32.mrb[0].mxu0
  %v701 = vadd.f32 %v135, %v700
  %702 = vmatprep.mubr.bf16.mxu0 0
  %703 = vmatmul.mubr.bf16.gmra.mrb[0].mxu0 %v293
  %v704 = vpop.f32.mrb[0].mxu0
  %v705 = vadd.f32 %v131, %v704
  %v706 = vpop.f32.mrb[0].mxu0
  %v707 = vadd.f32 %v135, %v706
  %v708 = vpop.f32.mrb[0].mxu0
  %v709 = vadd.f32 %v131, %v708
  %v710 = vpop.f32.mrb[0].mxu0
  %v711 = vadd.f32 %v135, %v710
  %712 = vmatprep.mubr.bf16.mxu0 0
  %713 = vmatmul.mubr.bf16.gmra.mrb[0].mxu0 %v294
  %v714 = vpop.f32.mrb[0].mxu0
  %v715 = vadd.f32 %v131, %v714
  %v716 = vpop.f32.mrb[0].mxu0
  %v717 = vadd.f32 %v135, %v716
  %v718 = vpop.f32.mrb[0].mxu0
  %v719 = vadd.f32 %v131, %v718
  %v720 = vpop.f32.mrb[0].mxu0
  %v721 = vadd.f32 %v135, %v720
  %722 = vmatprep.mubr.bf16.mxu0 0
  %723 = vmatmul.mubr.bf16.gmra.mrb[0].mxu0 %v295
  %v724 = vpop.f32.mrb[0].mxu0
  %v725 = vadd.f32 %v131, %v724
  %v726 = vpop.f32.mrb[0].mxu0
  %v727 = vadd.f32 %v135, %v726
  %v728 = vpop.f32.mrb[0].mxu0
  %v729 = vadd.f32 %v131, %v728
  %v730 = vpop.f32.mrb[0].mxu0
  %v731 = vadd.f32 %v135, %v730
  %732 = vmatprep.mubr.bf16.mxu0 0
  %733 = vmatmul.mubr.bf16.gmra.mrb[0].mxu0 %v296
  %v734 = vpop.f32.mrb[0].mxu0
  %v735 = vadd.f32 %v131, %v734
  %v736 = vpop.f32.mrb[0].mxu0
  %v737 = vadd.f32 %v135, %v736
  %v738 = vpop.f32.mrb[0].mxu0
  %v739 = vadd.f32 %v131, %v738
  %v740 = vpop.f32.mrb[0].mxu0
  %v741 = vadd.f32 %v135, %v740
  %742 = vmatprep.mubr.bf16.mxu0 0
  %743 = vmatmul.mubr.bf16.gmra.mrb[0].mxu0 %v297
  %v744 = vpop.f32.mrb[0].mxu0
  %v745 = vadd.f32 %v131, %v744
  %v746 = vpop.f32.mrb[0].mxu0
  %v747 = vadd.f32 %v135, %v746
  %v748 = vpop.f32.mrb[0].mxu0
  %v749 = vadd.f32 %v131, %v748
  %v750 = vpop.f32.mrb[0].mxu0
  %v751 = vadd.f32 %v135, %v750
  %752 = vmatprep.mubr.bf16.mxu0 0
  %753 = vmatmul.mubr.bf16.gmra.mrb[0].mxu0 %v298
  %v754 = vpop.f32.mrb[0].mxu0
  %v755 = vadd.f32 %v131, %v754
  %v756 = vpop.f32.mrb[0].mxu0
  %v757 = vadd.f32 %v135, %v756
  %v758 = vpop.f32.mrb[0].mxu0
  %v759 = vadd.f32 %v131, %v758
  %v760 = vpop.f32.mrb[0].mxu0
  %v761 = vadd.f32 %v135, %v760
  %762 = vmatprep.mubr.bf16.mxu0 0
  %763 = vmatmul.mubr.bf16.gmra.mrb[0].mxu0 %v299
  %v764 = vpop.f32.mrb[0].mxu0
  %v765 = vadd.f32 %v131, %v764
  %v766 = vpop.f32.mrb[0].mxu0
  %v767 = vadd.f32 %v135, %v766
  %v768 = vpop.f32.mrb[0].mxu0
  %v769 = vadd.f32 %v131, %v768
  %v770 = vpop.f32.mrb[0].mxu0
  %v771 = vadd.f32 %v135, %v770
  %772 = vmatprep.mubr.bf16.mxu0 0
  %773 = vmatmul.mubr.bf16.gmra.mrb[0].mxu0 %v300
  %v774 = vpop.f32.mrb[0].mxu0
  %v775 = vadd.f32 %v131, %v774
  %v776 = vpop.f32.mrb[0].mxu0
  %v777 = vadd.f32 %v135, %v776
  %v778 = vpop.f32.mrb[0].mxu0
  %v779 = vadd.f32 %v131, %v778
  %v780 = vpop.f32.mrb[0].mxu0
  %v781 = vadd.f32 %v135, %v780
  %782 = vmatprep.mubr.bf16.mxu0 0
  %783 = vmatmul.mubr.bf16.gmra.mrb[0].mxu0 %v301
  %v784 = vpop.f32.mrb[0].mxu0
  %v785 = vadd.f32 %v131, %v784
  %v786 = vpop.f32.mrb[0].mxu0
  %v787 = vadd.f32 %v135, %v786
  %v788 = vpop.f32.mrb[0].mxu0
  %v789 = vadd.f32 %v131, %v788
  %v790 = vpop.f32.mrb[0].mxu0
  %v791 = vadd.f32 %v135, %v790
  %792 = vmatprep.mubr.bf16.mxu0 0
  %793 = vmatmul.mubr.bf16.gmra.mrb[0].mxu0 %v302
  %v794 = vpop.f32.mrb[0].mxu0
  %v795 = vadd.f32 %v131, %v794
  %v796 = vpop.f32.mrb[0].mxu0
  %v797 = vadd.f32 %v135, %v796
  %v798 = vpop.f32.mrb[0].mxu0
  %v799 = vadd.f32 %v131, %v798
  %v800 = vpop.f32.mrb[0].mxu0
  %v801 = vadd.f32 %v135, %v800
  %802 = vmatprep.mubr.bf16.mxu0 0
  %803 = vmatmul.mubr.bf16.gmra.mrb[0].mxu0 %v303
  %v804 = vpop.f32.mrb[0].mxu0
  %v805 = vadd.f32 %v131, %v804
  %v806 = vpop.f32.mrb[0].mxu0
  %v807 = vadd.f32 %v135, %v806
  %v808 = vpop.f32.mrb[0].mxu0
  %v809 = vadd.f32 %v131, %v808
  %v810 = vpop.f32.mrb[0].mxu0
  %v811 = vadd.f32 %v135, %v810
  %812 = vmatprep.mubr.bf16.mxu0 0
  %813 = vmatmul.mubr.bf16.gmra.mrb[0].mxu0 %v304
  %v814 = vpop.f32.mrb[0].mxu0
  %v815 = vadd.f32 %v131, %v814
  %v816 = vpop.f32.mrb[0].mxu0
  %v817 = vadd.f32 %v135, %v816
  %v818 = vpop.f32.mrb[0].mxu0
  %v819 = vadd.f32 %v131, %v818
  %v820 = vpop.f32.mrb[0].mxu0
  %v821 = vadd.f32 %v135, %v820
  %822 = vmatprep.mubr.bf16.mxu0 0
  %823 = vmatmul.mubr.bf16.gmra.mrb[0].mxu0 %v305
  %v824 = vpop.f32.mrb[0].mxu0
  %v825 = vadd.f32 %v131, %v824
  %v826 = vpop.f32.mrb[0].mxu0
  %v827 = vadd.f32 %v135, %v826
  %v828 = vpop.f32.mrb[0].mxu0
  %v829 = vadd.f32 %v131, %v828
  %v830 = vpop.f32.mrb[0].mxu0
  %v831 = vadd.f32 %v135, %v830
  %832 = vmatprep.mubr.bf16.mxu0 0
  %833 = vmatmul.mubr.bf16.gmra.mrb[0].mxu0 %v306
  %v834 = vpop.f32.mrb[0].mxu0
  %v835 = vadd.f32 %v131, %v834
  %v836 = vpop.f32.mrb[0].mxu0
  %v837 = vadd.f32 %v135, %v836
  %v838 = vpop.f32.mrb[0].mxu0
  %v839 = vadd.f32 %v131, %v838
  %v840 = vpop.f32.mrb[0].mxu0
  %v841 = vadd.f32 %v135, %v840
  %842 = vmatprep.mubr.bf16.mxu0 0
  %843 = vmatmul.mubr.bf16.gmra.mrb[0].mxu0 %v307
  %v844 = vpop.f32.mrb[0].mxu0
  %v845 = vadd.f32 %v131, %v844
  %v846 = vpop.f32.mrb[0].mxu0
  %v847 = vadd.f32 %v135, %v846
  %v848 = vpop.f32.mrb[0].mxu0
  %v849 = vadd.f32 %v131, %v848
  %v850 = vpop.f32.mrb[0].mxu0
  %v851 = vadd.f32 %v135, %v850
  %852 = vdwg.mxu0
  %853 = vmatprep.subr.bf16.mxu0 %v439
  %854 = vmatpush1.bf16.msra.mxu0 %v438
  %855 = vmatprep.subr.bf16.mxu0 %v443
  %856 = vmatpush1.bf16.msra.mxu0 %v442
  %857 = vmatprep.subr.bf16.mxu0 %v447
  %858 = vmatpush1.bf16.msra.mxu0 %v446
  %859 = vmatprep.subr.bf16.mxu0 %v451
  %860 = vmatpush1.bf16.msra.mxu0 %v450
  %861 = vmatprep.subr.bf16.mxu0 %v455
  %862 = vmatpush1.bf16.msra.mxu0 %v454
  %863 = vmatprep.subr.bf16.mxu0 %v459
  %864 = vmatpush1.bf16.msra.mxu0 %v458
  %865 = vmatprep.subr.bf16.mxu0 %v463
  %866 = vmatpush1.bf16.msra.mxu0 %v462
  %867 = vmatprep.subr.bf16.mxu0 %v467
  %868 = vmatpush1.bf16.msra.mxu0 %v466
  %869 = vmatprep.subr.bf16.mxu0 0
  %870 = vmatpush1.bf16.msra.mxu0 0
  %871 = vmatprep.subr.bf16.mxu0 0
  %872 = vmatpush1.bf16.msra.mxu0 0
  %873 = vmatprep.subr.bf16.mxu0 0
  %874 = vmatpush1.bf16.msra.mxu0 0
  %875 = vmatprep.subr.bf16.mxu0 0
  %876 = vmatpush1.bf16.msra.mxu0 0
  %877 = vmatprep.subr.bf16.mxu0 0
  %878 = vmatpush1.bf16.msra.mxu0 0
  %879 = vmatprep.subr.bf16.mxu0 0
  %880 = vmatpush1.bf16.msra.mxu0 0
  %881 = vmatprep.subr.bf16.mxu0 0
  %882 = vmatpush1.bf16.msra.mxu0 0
  %883 = vmatprep.subr.bf16.mxu0 0
  %884 = vmatpush1.bf16.msra.mxu0 0
  %885 = vmatprep.mubr.bf16.mxu0 0
  %886 = vmatmul.mubr.bf16.gmra.mrb[0].mxu0 %v276
  %v887 = vpop.f32.mrb[0].mxu0
  %v888 = vadd.f32 %v139, %v887
  %v889 = vpop.f32.mrb[0].mxu0
  %v890 = vadd.f32 %v143, %v889
  %v891 = vpop.f32.mrb[0].mxu0
  %v892 = vadd.f32 %v139, %v891
  %v893 = vpop.f32.mrb[0].mxu0
  %v894 = vadd.f32 %v143, %v893
  %895 = vmatprep.mubr.bf16.mxu0 0
  %896 = vmatmul.mubr.bf16.gmra.mrb[0].mxu0 %v277
  %v897 = vpop.f32.mrb[0].mxu0
  %v898 = vadd.f32 %v139, %v897
  %v899 = vpop.f32.mrb[0].mxu0
  %v900 = vadd.f32 %v143, %v899
  %v901 = vpop.f32.mrb[0].mxu0
  %v902 = vadd.f32 %v139, %v901
  %v903 = vpop.f32.mrb[0].mxu0
  %v904 = vadd.f32 %v143, %v903
  %905 = vmatprep.mubr.bf16.mxu0 0
  %906 = vmatmul.mubr.bf16.gmra.mrb[0].mxu0 %v278
  %v907 = vpop.f32.mrb[0].mxu0
  %v908 = vadd.f32 %v139, %v907
  %v909 = vpop.f32.mrb[0].mxu0
  %v910 = vadd.f32 %v143, %v909
  %v911 = vpop.f32.mrb[0].mxu0
  %v912 = vadd.f32 %v139, %v911
  %v913 = vpop.f32.mrb[0].mxu0
  %v914 = vadd.f32 %v143, %v913
  %915 = vmatprep.mubr.bf16.mxu0 0
  %916 = vmatmul.mubr.bf16.gmra.mrb[0].mxu0 %v279
  %v917 = vpop.f32.mrb[0].mxu0
  %v918 = vadd.f32 %v139, %v917
  %v919 = vpop.f32.mrb[0].mxu0
  %v920 = vadd.f32 %v143, %v919
  %v921 = vpop.f32.mrb[0].mxu0
  %v922 = vadd.f32 %v139, %v921
  %v923 = vpop.f32.mrb[0].mxu0
  %v924 = vadd.f32 %v143, %v923
  %925 = vmatprep.mubr.bf16.mxu0 0
  %926 = vmatmul.mubr.bf16.gmra.mrb[0].mxu0 %v280
  %v927 = vpop.f32.mrb[0].mxu0
  %v928 = vadd.f32 %v139, %v927
  %v929 = vpop.f32.mrb[0].mxu0
  %v930 = vadd.f32 %v143, %v929
  %v931 = vpop.f32.mrb[0].mxu0
  %v932 = vadd.f32 %v139, %v931
  %v933 = vpop.f32.mrb[0].mxu0
  %v934 = vadd.f32 %v143, %v933
  %935 = vmatprep.mubr.bf16.mxu0 0
  %936 = vmatmul.mubr.bf16.gmra.mrb[0].mxu0 %v281
  %v937 = vpop.f32.mrb[0].mxu0
  %v938 = vadd.f32 %v139, %v937
  %v939 = vpop.f32.mrb[0].mxu0
  %v940 = vadd.f32 %v143, %v939
  %v941 = vpop.f32.mrb[0].mxu0
  %v942 = vadd.f32 %v139, %v941
  %v943 = vpop.f32.mrb[0].mxu0
  %v944 = vadd.f32 %v143, %v943
  %945 = vmatprep.mubr.bf16.mxu0 0
  %946 = vmatmul.mubr.bf16.gmra.mrb[0].mxu0 %v282
  %v947 = vpop.f32.mrb[0].mxu0
  %v948 = vadd.f32 %v139, %v947
  %v949 = vpop.f32.mrb[0].mxu0
  %v950 = vadd.f32 %v143, %v949
  %v951 = vpop.f32.mrb[0].mxu0
  %v952 = vadd.f32 %v139, %v951
  %v953 = vpop.f32.mrb[0].mxu0
  %v954 = vadd.f32 %v143, %v953
  %955 = vmatprep.mubr.bf16.mxu0 0
  %956 = vmatmul.mubr.bf16.gmra.mrb[0].mxu0 %v283
  %v957 = vpop.f32.mrb[0].mxu0
  %v958 = vadd.f32 %v139, %v957
  %v959 = vpop.f32.mrb[0].mxu0
  %v960 = vadd.f32 %v143, %v959
  %v961 = vpop.f32.mrb[0].mxu0
  %v962 = vadd.f32 %v139, %v961
  %v963 = vpop.f32.mrb[0].mxu0
  %v964 = vadd.f32 %v143, %v963
  %965 = vmatprep.mubr.bf16.mxu0 0
  %966 = vmatmul.mubr.bf16.gmra.mrb[0].mxu0 %v284
  %v967 = vpop.f32.mrb[0].mxu0
  %v968 = vadd.f32 %v139, %v967
  %v969 = vpop.f32.mrb[0].mxu0
  %v970 = vadd.f32 %v143, %v969
  %v971 = vpop.f32.mrb[0].mxu0
  %v972 = vadd.f32 %v139, %v971
  %v973 = vpop.f32.mrb[0].mxu0
  %v974 = vadd.f32 %v143, %v973
  %975 = vmatprep.mubr.bf16.mxu0 0
  %976 = vmatmul.mubr.bf16.gmra.mrb[0].mxu0 %v285
  %v977 = vpop.f32.mrb[0].mxu0
  %v978 = vadd.f32 %v139, %v977
  %v979 = vpop.f32.mrb[0].mxu0
  %v980 = vadd.f32 %v143, %v979
  %v981 = vpop.f32.mrb[0].mxu0
  %v982 = vadd.f32 %v139, %v981
  %v983 = vpop.f32.mrb[0].mxu0
  %v984 = vadd.f32 %v143, %v983
  %985 = vmatprep.mubr.bf16.mxu0 0
  %986 = vmatmul.mubr.bf16.gmra.mrb[0].mxu0 %v286
  %v987 = vpop.f32.mrb[0].mxu0
  %v988 = vadd.f32 %v139, %v987
  %v989 = vpop.f32.mrb[0].mxu0
  %v990 = vadd.f32 %v143, %v989
  %v991 = vpop.f32.mrb[0].mxu0
  %v992 = vadd.f32 %v139, %v991
  %v993 = vpop.f32.mrb[0].mxu0
  %v994 = vadd.f32 %v143, %v993
  %995 = vmatprep.mubr.bf16.mxu0 0
  %996 = vmatmul.mubr.bf16.gmra.mrb[0].mxu0 %v287
  %v997 = vpop.f32.mrb[0].mxu0
  %v998 = vadd.f32 %v139, %v997
  %v999 = vpop.f32.mrb[0].mxu0
  %v1000 = vadd.f32 %v143, %v999
  %v1001 = vpop.f32.mrb[0].mxu0
  %v1002 = vadd.f32 %v139, %v1001
  %v1003 = vpop.f32.mrb[0].mxu0
  %v1004 = vadd.f32 %v143, %v1003
  %1005 = vmatprep.mubr.bf16.mxu0 0
  %1006 = vmatmul.mubr.bf16.gmra.mrb[0].mxu0 %v288
  %v1007 = vpop.f32.mrb[0].mxu0
  %v1008 = vadd.f32 %v139, %v1007
  %v1009 = vpop.f32.mrb[0].mxu0
  %v1010 = vadd.f32 %v143, %v1009
  %v1011 = vpop.f32.mrb[0].mxu0
  %v1012 = vadd.f32 %v139, %v1011
  %v1013 = vpop.f32.mrb[0].mxu0
  %v1014 = vadd.f32 %v143, %v1013
  %1015 = vmatprep.mubr.bf16.mxu0 0
  %1016 = vmatmul.mubr.bf16.gmra.mrb[0].mxu0 %v289
  %v1017 = vpop.f32.mrb[0].mxu0
  %v1018 = vadd.f32 %v139, %v1017
  %v1019 = vpop.f32.mrb[0].mxu0
  %v1020 = vadd.f32 %v143, %v1019
  %v1021 = vpop.f32.mrb[0].mxu0
  %v1022 = vadd.f32 %v139, %v1021
  %v1023 = vpop.f32.mrb[0].mxu0
  %v1024 = vadd.f32 %v143, %v1023
  %1025 = vmatprep.mubr.bf16.mxu0 0
  %1026 = vmatmul.mubr.bf16.gmra.mrb[0].mxu0 %v290
  %v1027 = vpop.f32.mrb[0].mxu0
  %v1028 = vadd.f32 %v139, %v1027
  %v1029 = vpop.f32.mrb[0].mxu0
  %v1030 = vadd.f32 %v143, %v1029
  %v1031 = vpop.f32.mrb[0].mxu0
  %v1032 = vadd.f32 %v139, %v1031
  %v1033 = vpop.f32.mrb[0].mxu0
  %v1034 = vadd.f32 %v143, %v1033
  %1035 = vmatprep.mubr.bf16.mxu0 0
  %1036 = vmatmul.mubr.bf16.gmra.mrb[0].mxu0 %v291
  %v1037 = vpop.f32.mrb[0].mxu0
  %v1038 = vadd.f32 %v139, %v1037
  %v1039 = vpop.f32.mrb[0].mxu0
  %v1040 = vadd.f32 %v143, %v1039
  %v1041 = vpop.f32.mrb[0].mxu0
  %v1042 = vadd.f32 %v139, %v1041
  %v1043 = vpop.f32.mrb[0].mxu0
  %v1044 = vadd.f32 %v143, %v1043
  %1045 = vmatprep.mubr.bf16.mxu0 0
  %1046 = vmatmul.mubr.bf16.gmra.mrb[0].mxu0 %v292
  %v1047 = vpop.f32.mrb[0].mxu0
  %v1048 = vadd.f32 %v139, %v1047
  %v1049 = vpop.f32.mrb[0].mxu0
  %v1050 = vadd.f32 %v143, %v1049
  %v1051 = vpop.f32.mrb[0].mxu0
  %v1052 = vadd.f32 %v139, %v1051
  %v1053 = vpop.f32.mrb[0].mxu0
  %v1054 = vadd.f32 %v143, %v1053
  %1055 = vmatprep.mubr.bf16.mxu0 0
  %1056 = vmatmul.mubr.bf16.gmra.mrb[0].mxu0 %v293
  %v1057 = vpop.f32.mrb[0].mxu0
  %v1058 = vadd.f32 %v139, %v1057
  %v1059 = vpop.f32.mrb[0].mxu0
  %v1060 = vadd.f32 %v143, %v1059
  %v1061 = vpop.f32.mrb[0].mxu0
  %v1062 = vadd.f32 %v139, %v1061
  %v1063 = vpop.f32.mrb[0].mxu0
  %v1064 = vadd.f32 %v143, %v1063
  %1065 = vmatprep.mubr.bf16.mxu0 0
  %1066 = vmatmul.mubr.bf16.gmra.mrb[0].mxu0 %v294
  %v1067 = vpop.f32.mrb[0].mxu0
  %v1068 = vadd.f32 %v139, %v1067
  %v1069 = vpop.f32.mrb[0].mxu0
  %v1070 = vadd.f32 %v143, %v1069
  %v1071 = vpop.f32.mrb[0].mxu0
  %v1072 = vadd.f32 %v139, %v1071
  %v1073 = vpop.f32.mrb[0].mxu0
  %v1074 = vadd.f32 %v143, %v1073
  %1075 = vmatprep.mubr.bf16.mxu0 0
  %1076 = vmatmul.mubr.bf16.gmra.mrb[0].mxu0 %v295
  %v1077 = vpop.f32.mrb[0].mxu0
  %v1078 = vadd.f32 %v139, %v1077
  %v1079 = vpop.f32.mrb[0].mxu0
  %v1080 = vadd.f32 %v143, %v1079
  %v1081 = vpop.f32.mrb[0].mxu0
  %v1082 = vadd.f32 %v139, %v1081
  %v1083 = vpop.f32.mrb[0].mxu0
  %v1084 = vadd.f32 %v143, %v1083
  %1085 = vmatprep.mubr.bf16.mxu0 0
  %1086 = vmatmul.mubr.bf16.gmra.mrb[0].mxu0 %v296
  %v1087 = vpop.f32.mrb[0].mxu0
  %v1088 = vadd.f32 %v139, %v1087
  %v1089 = vpop.f32.mrb[0].mxu0
  %v1090 = vadd.f32 %v143, %v1089
  %v1091 = vpop.f32.mrb[0].mxu0
  %v1092 = vadd.f32 %v139, %v1091
  %v1093 = vpop.f32.mrb[0].mxu0
  %v1094 = vadd.f32 %v143, %v1093
  %1095 = vmatprep.mubr.bf16.mxu0 0
  %1096 = vmatmul.mubr.bf16.gmra.mrb[0].mxu0 %v297
  %v1097 = vpop.f32.mrb[0].mxu0
  %v1098 = vadd.f32 %v139, %v1097
  %v1099 = vpop.f32.mrb[0].mxu0
  %v1100 = vadd.f32 %v143, %v1099
  %v1101 = vpop.f32.mrb[0].mxu0
  %v1102 = vadd.f32 %v139, %v1101
  %v1103 = vpop.f32.mrb[0].mxu0
  %v1104 = vadd.f32 %v143, %v1103
  %1105 = vmatprep.mubr.bf16.mxu0 0
  %1106 = vmatmul.mubr.bf16.gmra.mrb[0].mxu0 %v298
  %v1107 = vpop.f32.mrb[0].mxu0
  %v1108 = vadd.f32 %v139, %v1107
  %v1109 = vpop.f32.mrb[0].mxu0
  %v1110 = vadd.f32 %v143, %v1109
  %v1111 = vpop.f32.mrb[0].mxu0
  %v1112 = vadd.f32 %v139, %v1111
  %v1113 = vpop.f32.mrb[0].mxu0
  %v1114 = vadd.f32 %v143, %v1113
  %1115 = vmatprep.mubr.bf16.mxu0 0
  %1116 = vmatmul.mubr.bf16.gmra.mrb[0].mxu0 %v299
  %v1117 = vpop.f32.mrb[0].mxu0
  %v1118 = vadd.f32 %v139, %v1117
  %v1119 = vpop.f32.mrb[0].mxu0
  %v1120 = vadd.f32 %v143, %v1119
  %v1121 = vpop.f32.mrb[0].mxu0
  %v1122 = vadd.f32 %v139, %v1121
  %v1123 = vpop.f32.mrb[0].mxu0
  %v1124 = vadd.f32 %v143, %v1123
  %1125 = vmatprep.mubr.bf16.mxu0 0
  %1126 = vmatmul.mubr.bf16.gmra.mrb[0].mxu0 %v300
  %v1127 = vpop.f32.mrb[0].mxu0
  %v1128 = vadd.f32 %v139, %v1127
  %v1129 = vpop.f32.mrb[0].mxu0
  %v1130 = vadd.f32 %v143, %v1129
  %v1131 = vpop.f32.mrb[0].mxu0
  %v1132 = vadd.f32 %v139, %v1131
  %v1133 = vpop.f32.mrb[0].mxu0
  %v1134 = vadd.f32 %v143, %v1133
  %1135 = vmatprep.mubr.bf16.mxu0 0
  %1136 = vmatmul.mubr.bf16.gmra.mrb[0].mxu0 %v301
  %v1137 = vpop.f32.mrb[0].mxu0
  %v1138 = vadd.f32 %v139, %v1137
  %v1139 = vpop.f32.mrb[0].mxu0
  %v1140 = vadd.f32 %v143, %v1139
  %v1141 = vpop.f32.mrb[0].mxu0
  %v1142 = vadd.f32 %v139, %v1141
  %v1143 = vpop.f32.mrb[0].mxu0
  %v1144 = vadd.f32 %v143, %v1143
  %1145 = vmatprep.mubr.bf16.mxu0 0
  %1146 = vmatmul.mubr.bf16.gmra.mrb[0].mxu0 %v302
  %v1147 = vpop.f32.mrb[0].mxu0
  %v1148 = vadd.f32 %v139, %v1147
  %v1149 = vpop.f32.mrb[0].mxu0
  %v1150 = vadd.f32 %v143, %v1149
  %v1151 = vpop.f32.mrb[0].mxu0
  %v1152 = vadd.f32 %v139, %v1151
  %v1153 = vpop.f32.mrb[0].mxu0
  %v1154 = vadd.f32 %v143, %v1153
  %1155 = vmatprep.mubr.bf16.mxu0 0
  %1156 = vmatmul.mubr.bf16.gmra.mrb[0].mxu0 %v303
  %v1157 = vpop.f32.mrb[0].mxu0
  %v1158 = vadd.f32 %v139, %v1157
  %v1159 = vpop.f32.mrb[0].mxu0
  %v1160 = vadd.f32 %v143, %v1159
  %v1161 = vpop.f32.mrb[0].mxu0
  %v1162 = vadd.f32 %v139, %v1161
  %v1163 = vpop.f32.mrb[0].mxu0
  %v1164 = vadd.f32 %v143, %v1163
  %1165 = vmatprep.mubr.bf16.mxu0 0
  %1166 = vmatmul.mubr.bf16.gmra.mrb[0].mxu0 %v304
  %v1167 = vpop.f32.mrb[0].mxu0
  %v1168 = vadd.f32 %v139, %v1167
  %v1169 = vpop.f32.mrb[0].mxu0
  %v1170 = vadd.f32 %v143, %v1169
  %v1171 = vpop.f32.mrb[0].mxu0
  %v1172 = vadd.f32 %v139, %v1171
  %v1173 = vpop.f32.mrb[0].mxu0
  %v1174 = vadd.f32 %v143, %v1173
  %1175 = vmatprep.mubr.bf16.mxu0 0
  %1176 = vmatmul.mubr.bf16.gmra.mrb[0].mxu0 %v305
  %v1177 = vpop.f32.mrb[0].mxu0
  %v1178 = vadd.f32 %v139, %v1177
  %v1179 = vpop.f32.mrb[0].mxu0
  %v1180 = vadd.f32 %v143, %v1179
  %v1181 = vpop.f32.mrb[0].mxu0
  %v1182 = vadd.f32 %v139, %v1181
  %v1183 = vpop.f32.mrb[0].mxu0
  %v1184 = vadd.f32 %v143, %v1183
  %1185 = vmatprep.mubr.bf16.mxu0 0
  %1186 = vmatmul.mubr.bf16.gmra.mrb[0].mxu0 %v306
  %v1187 = vpop.f32.mrb[0].mxu0
  %v1188 = vadd.f32 %v139, %v1187
  %v1189 = vpop.f32.mrb[0].mxu0
  %v1190 = vadd.f32 %v143, %v1189
  %v1191 = vpop.f32.mrb[0].mxu0
  %v1192 = vadd.f32 %v139, %v1191
  %v1193 = vpop.f32.mrb[0].mxu0
  %v1194 = vadd.f32 %v143, %v1193
  %1195 = vmatprep.mubr.bf16.mxu0 0
  %1196 = vmatmul.mubr.bf16.gmra.mrb[0].mxu0 %v307
  %v1197 = vpop.f32.mrb[0].mxu0
  %v1198 = vadd.f32 %v139, %v1197
  %v1199 = vpop.f32.mrb[0].mxu0
  %v1200 = vadd.f32 %v143, %v1199
  %v1201 = vpop.f32.mrb[0].mxu0
  %v1202 = vadd.f32 %v139, %v1201
  %v1203 = vpop.f32.mrb[0].mxu0
  %v1204 = vadd.f32 %v143, %v1203
  %1205 = vdwg.mxu0
  %v1206 = vmax.f32 %v535, 0.0
  %v1207 = vmax.f32 %v537, 0.0
  %v1208 = vmax.f32 %v888, 0.0
  %v1209 = vmax.f32 %v890, 0.0
  %v1210 = vmax.f32 %v539, 0.0
  %v1211 = vmax.f32 %v541, 0.0
  %v1212 = vmax.f32 %v892, 0.0
  %v1213 = vmax.f32 %v894, 0.0
  %v1214 = vmax.f32 %v545, 0.0
  %v1215 = vmax.f32 %v547, 0.0
  %v1216 = vmax.f32 %v898, 0.0
  %v1217 = vmax.f32 %v900, 0.0
  %v1218 = vmax.f32 %v549, 0.0
  %v1219 = vmax.f32 %v551, 0.0
  %v1220 = vmax.f32 %v902, 0.0
  %v1221 = vmax.f32 %v904, 0.0
  %v1222 = vmax.f32 %v555, 0.0
  %v1223 = vmax.f32 %v557, 0.0
  %v1224 = vmax.f32 %v908, 0.0
  %v1225 = vmax.f32 %v910, 0.0
  %v1226 = vmax.f32 %v559, 0.0
  %v1227 = vmax.f32 %v561, 0.0
  %v1228 = vmax.f32 %v912, 0.0
  %v1229 = vmax.f32 %v914, 0.0
  %v1230 = vmax.f32 %v565, 0.0
  %v1231 = vmax.f32 %v567, 0.0
  %v1232 = vmax.f32 %v918, 0.0
  %v1233 = vmax.f32 %v920, 0.0
  %v1234 = vmax.f32 %v569, 0.0
  %v1235 = vmax.f32 %v571, 0.0
  %v1236 = vmax.f32 %v922, 0.0
  %v1237 = vmax.f32 %v924, 0.0
  %v1238 = vmax.f32 %v575, 0.0
  %v1239 = vmax.f32 %v577, 0.0
  %v1240 = vmax.f32 %v928, 0.0
  %v1241 = vmax.f32 %v930, 0.0
  %v1242 = vmax.f32 %v579, 0.0
  %v1243 = vmax.f32 %v581, 0.0
  %v1244 = vmax.f32 %v932, 0.0
  %v1245 = vmax.f32 %v934, 0.0
  %v1246 = vmax.f32 %v585, 0.0
  %v1247 = vmax.f32 %v587, 0.0
  %v1248 = vmax.f32 %v938, 0.0
  %v1249 = vmax.f32 %v940, 0.0
  %v1250 = vmax.f32 %v589, 0.0
  %v1251 = vmax.f32 %v591, 0.0
  %v1252 = vmax.f32 %v942, 0.0
  %v1253 = vmax.f32 %v944, 0.0
  %v1254 = vmax.f32 %v595, 0.0
  %v1255 = vmax.f32 %v597, 0.0
  %v1256 = vmax.f32 %v948, 0.0
  %v1257 = vmax.f32 %v950, 0.0
  %v1258 = vmax.f32 %v599, 0.0
  %v1259 = vmax.f32 %v601, 0.0
  %v1260 = vmax.f32 %v952, 0.0
  %v1261 = vmax.f32 %v954, 0.0
  %v1262 = vmax.f32 %v605, 0.0
  %v1263 = vmax.f32 %v607, 0.0
  %v1264 = vmax.f32 %v958, 0.0
  %v1265 = vmax.f32 %v960, 0.0
  %v1266 = vmax.f32 %v609, 0.0
  %v1267 = vmax.f32 %v611, 0.0
  %v1268 = vmax.f32 %v962, 0.0
  %v1269 = vmax.f32 %v964, 0.0
  %v1270 = vmax.f32 %v615, 0.0
  %v1271 = vmax.f32 %v617, 0.0
  %v1272 = vmax.f32 %v968, 0.0
  %v1273 = vmax.f32 %v970, 0.0
  %v1274 = vmax.f32 %v619, 0.0
  %v1275 = vmax.f32 %v621, 0.0
  %v1276 = vmax.f32 %v972, 0.0
  %v1277 = vmax.f32 %v974, 0.0
  %v1278 = vmax.f32 %v625, 0.0
  %v1279 = vmax.f32 %v627, 0.0
  %v1280 = vmax.f32 %v978, 0.0
  %v1281 = vmax.f32 %v980, 0.0
  %v1282 = vmax.f32 %v629, 0.0
  %v1283 = vmax.f32 %v631, 0.0
  %v1284 = vmax.f32 %v982, 0.0
  %v1285 = vmax.f32 %v984, 0.0
  %v1286 = vmax.f32 %v635, 0.0
  %v1287 = vmax.f32 %v637, 0.0
  %v1288 = vmax.f32 %v988, 0.0
  %v1289 = vmax.f32 %v990, 0.0
  %v1290 = vmax.f32 %v639, 0.0
  %v1291 = vmax.f32 %v641, 0.0
  %v1292 = vmax.f32 %v992, 0.0
  %v1293 = vmax.f32 %v994, 0.0
  %v1294 = vmax.f32 %v645, 0.0
  %v1295 = vmax.f32 %v647, 0.0
  %v1296 = vmax.f32 %v998, 0.0
  %v1297 = vmax.f32 %v1000, 0.0
  %v1298 = vmax.f32 %v649, 0.0
  %v1299 = vmax.f32 %v651, 0.0
  %v1300 = vmax.f32 %v1002, 0.0
  %v1301 = vmax.f32 %v1004, 0.0
  %v1302 = vmax.f32 %v655, 0.0
  %v1303 = vmax.f32 %v657, 0.0
  %v1304 = vmax.f32 %v1008, 0.0
  %v1305 = vmax.f32 %v1010, 0.0
  %v1306 = vmax.f32 %v659, 0.0
  %v1307 = vmax.f32 %v661, 0.0
  %v1308 = vmax.f32 %v1012, 0.0
  %v1309 = vmax.f32 %v1014, 0.0
  %v1310 = vmax.f32 %v665, 0.0
  %v1311 = vmax.f32 %v667, 0.0
  %v1312 = vmax.f32 %v1018, 0.0
  %v1313 = vmax.f32 %v1020, 0.0
  %v1314 = vmax.f32 %v669, 0.0
  %v1315 = vmax.f32 %v671, 0.0
  %v1316 = vmax.f32 %v1022, 0.0
  %v1317 = vmax.f32 %v1024, 0.0
  %v1318 = vmax.f32 %v675, 0.0
  %v1319 = vmax.f32 %v677, 0.0
  %v1320 = vmax.f32 %v1028, 0.0
  %v1321 = vmax.f32 %v1030, 0.0
  %v1322 = vmax.f32 %v679, 0.0
  %v1323 = vmax.f32 %v681, 0.0
  %v1324 = vmax.f32 %v1032, 0.0
  %v1325 = vmax.f32 %v1034, 0.0
  %v1326 = vmax.f32 %v685, 0.0
  %v1327 = vmax.f32 %v687, 0.0
  %v1328 = vmax.f32 %v1038, 0.0
  %v1329 = vmax.f32 %v1040, 0.0
  %v1330 = vmax.f32 %v689, 0.0
  %v1331 = vmax.f32 %v691, 0.0
  %v1332 = vmax.f32 %v1042, 0.0
  %v1333 = vmax.f32 %v1044, 0.0
  %v1334 = vmax.f32 %v695, 0.0
  %v1335 = vmax.f32 %v697, 0.0
  %v1336 = vmax.f32 %v1048, 0.0
  %v1337 = vmax.f32 %v1050, 0.0
  %v1338 = vmax.f32 %v699, 0.0
  %v1339 = vmax.f32 %v701, 0.0
  %v1340 = vmax.f32 %v1052, 0.0
  %v1341 = vmax.f32 %v1054, 0.0
  %v1342 = vmax.f32 %v705, 0.0
  %v1343 = vmax.f32 %v707, 0.0
  %v1344 = vmax.f32 %v1058, 0.0
  %v1345 = vmax.f32 %v1060, 0.0
  %v1346 = vmax.f32 %v709, 0.0
  %v1347 = vmax.f32 %v711, 0.0
  %v1348 = vmax.f32 %v1062, 0.0
  %v1349 = vmax.f32 %v1064, 0.0
  %v1350 = vmax.f32 %v715, 0.0
  %v1351 = vmax.f32 %v717, 0.0
  %v1352 = vmax.f32 %v1068, 0.0
  %v1353 = vmax.f32 %v1070, 0.0
  %v1354 = vmax.f32 %v719, 0.0
  %v1355 = vmax.f32 %v721, 0.0
  %v1356 = vmax.f32 %v1072, 0.0
  %v1357 = vmax.f32 %v1074, 0.0
  %v1358 = vmax.f32 %v725, 0.0
  %v1359 = vmax.f32 %v727, 0.0
  %v1360 = vmax.f32 %v1078, 0.0
  %v1361 = vmax.f32 %v1080, 0.0
  %v1362 = vmax.f32 %v729, 0.0
  %v1363 = vmax.f32 %v731, 0.0
  %v1364 = vmax.f32 %v1082, 0.0
  %v1365 = vmax.f32 %v1084, 0.0
  %v1366 = vmax.f32 %v735, 0.0
  %v1367 = vmax.f32 %v737, 0.0
  %v1368 = vmax.f32 %v1088, 0.0
  %v1369 = vmax.f32 %v1090, 0.0
  %v1370 = vmax.f32 %v739, 0.0
  %v1371 = vmax.f32 %v741, 0.0
  %v1372 = vmax.f32 %v1092, 0.0
  %v1373 = vmax.f32 %v1094, 0.0
  %v1374 = vmax.f32 %v745, 0.0
  %v1375 = vmax.f32 %v747, 0.0
  %v1376 = vmax.f32 %v1098, 0.0
  %v1377 = vmax.f32 %v1100, 0.0
  %v1378 = vmax.f32 %v749, 0.0
  %v1379 = vmax.f32 %v751, 0.0
  %v1380 = vmax.f32 %v1102, 0.0
  %v1381 = vmax.f32 %v1104, 0.0
  %v1382 = vmax.f32 %v755, 0.0
  %v1383 = vmax.f32 %v757, 0.0
  %v1384 = vmax.f32 %v1108, 0.0
  %v1385 = vmax.f32 %v1110, 0.0
  %v1386 = vmax.f32 %v759, 0.0
  %v1387 = vmax.f32 %v761, 0.0
  %v1388 = vmax.f32 %v1112, 0.0
  %v1389 = vmax.f32 %v1114, 0.0
  %v1390 = vmax.f32 %v765, 0.0
  %v1391 = vmax.f32 %v767, 0.0
  %v1392 = vmax.f32 %v1118, 0.0
  %v1393 = vmax.f32 %v1120, 0.0
  %v1394 = vmax.f32 %v769, 0.0
  %v1395 = vmax.f32 %v771, 0.0
  %v1396 = vmax.f32 %v1122, 0.0
  %v1397 = vmax.f32 %v1124, 0.0
  %v1398 = vmax.f32 %v775, 0.0
  %v1399 = vmax.f32 %v777, 0.0
  %v1400 = vmax.f32 %v1128, 0.0
  %v1401 = vmax.f32 %v1130, 0.0
  %v1402 = vmax.f32 %v779, 0.0
  %v1403 = vmax.f32 %v781, 0.0
  %v1404 = vmax.f32 %v1132, 0.0
  %v1405 = vmax.f32 %v1134, 0.0
  %v1406 = vmax.f32 %v785, 0.0
  %v1407 = vmax.f32 %v787, 0.0
  %v1408 = vmax.f32 %v1138, 0.0
  %v1409 = vmax.f32 %v1140, 0.0
  %v1410 = vmax.f32 %v789, 0.0
  %v1411 = vmax.f32 %v791, 0.0
  %v1412 = vmax.f32 %v1142, 0.0
  %v1413 = vmax.f32 %v1144, 0.0
  %v1414 = vmax.f32 %v795, 0.0
  %v1415 = vmax.f32 %v797, 0.0
  %v1416 = vmax.f32 %v1148, 0.0
  %v1417 = vmax.f32 %v1150, 0.0
  %v1418 = vmax.f32 %v799, 0.0
  %v1419 = vmax.f32 %v801, 0.0
  %v1420 = vmax.f32 %v1152, 0.0
  %v1421 = vmax.f32 %v1154, 0.0
  %v1422 = vmax.f32 %v805, 0.0
  %v1423 = vmax.f32 %v807, 0.0
  %v1424 = vmax.f32 %v1158, 0.0
  %v1425 = vmax.f32 %v1160, 0.0
  %v1426 = vmax.f32 %v809, 0.0
  %v1427 = vmax.f32 %v811, 0.0
  %v1428 = vmax.f32 %v1162, 0.0
  %v1429 = vmax.f32 %v1164, 0.0
  %v1430 = vmax.f32 %v815, 0.0
  %v1431 = vmax.f32 %v817, 0.0
  %v1432 = vmax.f32 %v1168, 0.0
  %v1433 = vmax.f32 %v1170, 0.0
  %v1434 = vmax.f32 %v819, 0.0
  %v1435 = vmax.f32 %v821, 0.0
  %v1436 = vmax.f32 %v1172, 0.0
  %v1437 = vmax.f32 %v1174, 0.0
  %v1438 = vmax.f32 %v825, 0.0
  %v1439 = vmax.f32 %v827, 0.0
  %v1440 = vmax.f32 %v1178, 0.0
  %v1441 = vmax.f32 %v1180, 0.0
  %v1442 = vmax.f32 %v829, 0.0
  %v1443 = vmax.f32 %v831, 0.0
  %v1444 = vmax.f32 %v1182, 0.0
  %v1445 = vmax.f32 %v1184, 0.0
  %v1446 = vmax.f32 %v835, 0.0
  %v1447 = vmax.f32 %v837, 0.0
  %v1448 = vmax.f32 %v1188, 0.0
  %v1449 = vmax.f32 %v1190, 0.0
  %v1450 = vmax.f32 %v839, 0.0
  %v1451 = vmax.f32 %v841, 0.0
  %v1452 = vmax.f32 %v1192, 0.0
  %v1453 = vmax.f32 %v1194, 0.0
  %v1454 = vmax.f32 %v845, 0.0
  %v1455 = vmax.f32 %v847, 0.0
  %v1456 = vmax.f32 %v1198, 0.0
  %v1457 = vmax.f32 %v1200, 0.0
  %v1458 = vmax.f32 %v849, 0.0
  %v1459 = vmax.f32 %v851, 0.0
  %v1460 = vmax.f32 %v1202, 0.0
  %v1461 = vmax.f32 %v1204, 0.0
  %v1462 = vld [vmem:[%s3] sm:$0xff]
  %v1463 = vld [vmem:[%s3 + $0x8] sm:$0xff]
  %v1464 = vpack.c.bf16 %v1210, %v1206
  %v1465 = vpack.c.bf16 %v1211, %v1207
  %v1466 = vpack.c.bf16 %v1212, %v1208
  %v1467 = vpack.c.bf16 %v1213, %v1209
  %v1468 = vpack.c.bf16 %v1218, %v1214
  %v1469 = vpack.c.bf16 %v1219, %v1215
  %v1470 = vpack.c.bf16 %v1220, %v1216
  %v1471 = vpack.c.bf16 %v1221, %v1217
  %v1472 = vpack.c.bf16 %v1226, %v1222
  %v1473 = vpack.c.bf16 %v1227, %v1223
  %v1474 = vpack.c.bf16 %v1228, %v1224
  %v1475 = vpack.c.bf16 %v1229, %v1225
  %v1476 = vpack.c.bf16 %v1234, %v1230
  %v1477 = vpack.c.bf16 %v1235, %v1231
  %v1478 = vpack.c.bf16 %v1236, %v1232
  %v1479 = vpack.c.bf16 %v1237, %v1233
  %v1480 = vpack.c.bf16 %v1242, %v1238
  %v1481 = vpack.c.bf16 %v1243, %v1239
  %v1482 = vpack.c.bf16 %v1244, %v1240
  %v1483 = vpack.c.bf16 %v1245, %v1241
  %v1484 = vpack.c.bf16 %v1250, %v1246
  %v1485 = vpack.c.bf16 %v1251, %v1247
  %v1486 = vpack.c.bf16 %v1252, %v1248
  %v1487 = vpack.c.bf16 %v1253, %v1249
  %v1488 = vpack.c.bf16 %v1258, %v1254
  %v1489 = vpack.c.bf16 %v1259, %v1255
  %v1490 = vpack.c.bf16 %v1260, %v1256
  %v1491 = vpack.c.bf16 %v1261, %v1257
  %v1492 = vpack.c.bf16 %v1266, %v1262
  %v1493 = vpack.c.bf16 %v1267, %v1263
  %v1494 = vpack.c.bf16 %v1268, %v1264
  %v1495 = vpack.c.bf16 %v1269, %v1265
  %v1496 = vpack.c.bf16 %v1274, %v1270
  %v1497 = vpack.c.bf16 %v1275, %v1271
  %v1498 = vpack.c.bf16 %v1276, %v1272
  %v1499 = vpack.c.bf16 %v1277, %v1273
  %v1500 = vpack.c.bf16 %v1282, %v1278
  %v1501 = vpack.c.bf16 %v1283, %v1279
  %v1502 = vpack.c.bf16 %v1284, %v1280
  %v1503 = vpack.c.bf16 %v1285, %v1281
  %v1504 = vpack.c.bf16 %v1290, %v1286
  %v1505 = vpack.c.bf16 %v1291, %v1287
  %v1506 = vpack.c.bf16 %v1292, %v1288
  %v1507 = vpack.c.bf16 %v1293, %v1289
  %v1508 = vpack.c.bf16 %v1298, %v1294
  %v1509 = vpack.c.bf16 %v1299, %v1295
  %v1510 = vpack.c.bf16 %v1300, %v1296
  %v1511 = vpack.c.bf16 %v1301, %v1297
  %v1512 = vpack.c.bf16 %v1306, %v1302
  %v1513 = vpack.c.bf16 %v1307, %v1303
  %v1514 = vpack.c.bf16 %v1308, %v1304
  %v1515 = vpack.c.bf16 %v1309, %v1305
  %v1516 = vpack.c.bf16 %v1314, %v1310
  %v1517 = vpack.c.bf16 %v1315, %v1311
  %v1518 = vpack.c.bf16 %v1316, %v1312
  %v1519 = vpack.c.bf16 %v1317, %v1313
  %v1520 = vpack.c.bf16 %v1322, %v1318
  %v1521 = vpack.c.bf16 %v1323, %v1319
  %v1522 = vpack.c.bf16 %v1324, %v1320
  %v1523 = vpack.c.bf16 %v1325, %v1321
  %v1524 = vpack.c.bf16 %v1330, %v1326
  %v1525 = vpack.c.bf16 %v1331, %v1327
  %v1526 = vpack.c.bf16 %v1332, %v1328
  %v1527 = vpack.c.bf16 %v1333, %v1329
  %v1528 = vpack.c.bf16 %v1338, %v1334
  %v1529 = vpack.c.bf16 %v1339, %v1335
  %v1530 = vpack.c.bf16 %v1340, %v1336
  %v1531 = vpack.c.bf16 %v1341, %v1337
  %v1532 = vpack.c.bf16 %v1346, %v1342
  %v1533 = vpack.c.bf16 %v1347, %v1343
  %v1534 = vpack.c.bf16 %v1348, %v1344
  %v1535 = vpack.c.bf16 %v1349, %v1345
  %v1536 = vpack.c.bf16 %v1354, %v1350
  %v1537 = vpack.c.bf16 %v1355, %v1351
  %v1538 = vpack.c.bf16 %v1356, %v1352
  %v1539 = vpack.c.bf16 %v1357, %v1353
  %v1540 = vpack.c.bf16 %v1362, %v1358
  %v1541 = vpack.c.bf16 %v1363, %v1359
  %v1542 = vpack.c.bf16 %v1364, %v1360
  %v1543 = vpack.c.bf16 %v1365, %v1361
  %v1544 = vpack.c.bf16 %v1370, %v1366
  %v1545 = vpack.c.bf16 %v1371, %v1367
  %v1546 = vpack.c.bf16 %v1372, %v1368
  %v1547 = vpack.c.bf16 %v1373, %v1369
  %v1548 = vpack.c.bf16 %v1378, %v1374
  %v1549 = vpack.c.bf16 %v1379, %v1375
  %v1550 = vpack.c.bf16 %v1380, %v1376
  %v1551 = vpack.c.bf16 %v1381, %v1377
  %v1552 = vpack.c.bf16 %v1386, %v1382
  %v1553 = vpack.c.bf16 %v1387, %v1383
  %v1554 = vpack.c.bf16 %v1388, %v1384
  %v1555 = vpack.c.bf16 %v1389, %v1385
  %v1556 = vpack.c.bf16 %v1394, %v1390
  %v1557 = vpack.c.bf16 %v1395, %v1391
  %v1558 = vpack.c.bf16 %v1396, %v1392
  %v1559 = vpack.c.bf16 %v1397, %v1393
  %v1560 = vpack.c.bf16 %v1402, %v1398
  %v1561 = vpack.c.bf16 %v1403, %v1399
  %v1562 = vpack.c.bf16 %v1404, %v1400
  %v1563 = vpack.c.bf16 %v1405, %v1401
  %v1564 = vpack.c.bf16 %v1410, %v1406
  %v1565 = vpack.c.bf16 %v1411, %v1407
  %v1566 = vpack.c.bf16 %v1412, %v1408
  %v1567 = vpack.c.bf16 %v1413, %v1409
  %v1568 = vpack.c.bf16 %v1418, %v1414
  %v1569 = vpack.c.bf16 %v1419, %v1415
  %v1570 = vpack.c.bf16 %v1420, %v1416
  %v1571 = vpack.c.bf16 %v1421, %v1417
  %v1572 = vpack.c.bf16 %v1426, %v1422
  %v1573 = vpack.c.bf16 %v1427, %v1423
  %v1574 = vpack.c.bf16 %v1428, %v1424
  %v1575 = vpack.c.bf16 %v1429, %v1425
  %v1576 = vpack.c.bf16 %v1434, %v1430
  %v1577 = vpack.c.bf16 %v1435, %v1431
  %v1578 = vpack.c.bf16 %v1436, %v1432
  %v1579 = vpack.c.bf16 %v1437, %v1433
  %v1580 = vpack.c.bf16 %v1442, %v1438
  %v1581 = vpack.c.bf16 %v1443, %v1439
  %v1582 = vpack.c.bf16 %v1444, %v1440
  %v1583 = vpack.c.bf16 %v1445, %v1441
  %v1584 = vpack.c.bf16 %v1450, %v1446
  %v1585 = vpack.c.bf16 %v1451, %v1447
  %v1586 = vpack.c.bf16 %v1452, %v1448
  %v1587 = vpack.c.bf16 %v1453, %v1449
  %v1588 = vpack.c.bf16 %v1458, %v1454
  %v1589 = vpack.c.bf16 %v1459, %v1455
  %v1590 = vpack.c.bf16 %v1460, %v1456
  %v1591 = vpack.c.bf16 %v1461, %v1457
  %v1594 = vunpack.c.l.b16 %v1462
  %v1595 = vunpack.c.h.b16 %v1462
  %v1596 = vunpack.c.l.b16 %v1463
  %v1597 = vunpack.c.h.b16 %v1463
  %v1598 = vpack.c.b16 %v1594, %v1594
  %v1599 = vpack.c.b16 %v1595, %v1595
  %v1600 = vpack.c.b16 %v1596, %v1596
  %v1601 = vpack.c.b16 %v1597, %v1597
  %1606 = vmatprep.subr.bf16.mxu0 %v1465
  %1607 = vmatpush1.bf16.msra.mxu0 %v1464
  %1608 = vmatprep.subr.bf16.mxu0 %v1469
  %1609 = vmatpush1.bf16.msra.mxu0 %v1468
  %1610 = vmatprep.subr.bf16.mxu0 %v1473
  %1611 = vmatpush1.bf16.msra.mxu0 %v1472
  %1612 = vmatprep.subr.bf16.mxu0 %v1477
  %1613 = vmatpush1.bf16.msra.mxu0 %v1476
  %1614 = vmatprep.subr.bf16.mxu0 %v1481
  %1615 = vmatpush1.bf16.msra.mxu0 %v1480
  %1616 = vmatprep.subr.bf16.mxu0 %v1485
  %1617 = vmatpush1.bf16.msra.mxu0 %v1484
  %1618 = vmatprep.subr.bf16.mxu0 %v1489
  %1619 = vmatpush1.bf16.msra.mxu0 %v1488
  %1620 = vmatprep.subr.bf16.mxu0 %v1493
  %1621 = vmatpush1.bf16.msra.mxu0 %v1492
  %1622 = vmatprep.subr.bf16.mxu0 %v1497
  %1623 = vmatpush1.bf16.msra.mxu0 %v1496
  %1624 = vmatprep.subr.bf16.mxu0 %v1501
  %1625 = vmatpush1.bf16.msra.mxu0 %v1500
  %1626 = vmatprep.subr.bf16.mxu0 %v1505
  %1627 = vmatpush1.bf16.msra.mxu0 %v1504
  %1628 = vmatprep.subr.bf16.mxu0 %v1509
  %1629 = vmatpush1.bf16.msra.mxu0 %v1508
  %1630 = vmatprep.subr.bf16.mxu0 %v1513
  %1631 = vmatpush1.bf16.msra.mxu0 %v1512
  %1632 = vmatprep.subr.bf16.mxu0 %v1517
  %1633 = vmatpush1.bf16.msra.mxu0 %v1516
  %1634 = vmatprep.subr.bf16.mxu0 %v1521
  %1635 = vmatpush1.bf16.msra.mxu0 %v1520
  %1636 = vmatprep.subr.bf16.mxu0 %v1525
  %1637 = vmatpush1.bf16.msra.mxu0 %v1524
  %1638 = vmatprep.mubr.bf16.mxu0 %v1599
  %1639 = vmatmul.mubr.bf16.gmra.mrb[0].mxu0 %v1598
  %v1640 = vpop.f32.mrb[0].mxu0
  %v1641 = vadd.f32 0.0, %v1640
  %v1642 = vpop.f32.mrb[0].mxu0
  %v1643 = vadd.f32 0.0, %v1642
  %v1644 = vpop.f32.mrb[0].mxu0
  %v1645 = vpop.f32.mrb[0].mxu0
  %1646 = vdwg.mxu0
  %1647 = vmatprep.subr.bf16.mxu0 %v1529
  %1648 = vmatpush1.bf16.msra.mxu0 %v1528
  %1649 = vmatprep.subr.bf16.mxu0 %v1533
  %1650 = vmatpush1.bf16.msra.mxu0 %v1532
  %1651 = vmatprep.subr.bf16.mxu0 %v1537
  %1652 = vmatpush1.bf16.msra.mxu0 %v1536
  %1653 = vmatprep.subr.bf16.mxu0 %v1541
  %1654 = vmatpush1.bf16.msra.mxu0 %v1540
  %1655 = vmatprep.subr.bf16.mxu0 %v1545
  %1656 = vmatpush1.bf16.msra.mxu0 %v1544
  %1657 = vmatprep.subr.bf16.mxu0 %v1549
  %1658 = vmatpush1.bf16.msra.mxu0 %v1548
  %1659 = vmatprep.subr.bf16.mxu0 %v1553
  %1660 = vmatpush1.bf16.msra.mxu0 %v1552
  %1661 = vmatprep.subr.bf16.mxu0 %v1557
  %1662 = vmatpush1.bf16.msra.mxu0 %v1556
  %1663 = vmatprep.subr.bf16.mxu0 %v1561
  %1664 = vmatpush1.bf16.msra.mxu0 %v1560
  %1665 = vmatprep.subr.bf16.mxu0 %v1565
  %1666 = vmatpush1.bf16.msra.mxu0 %v1564
  %1667 = vmatprep.subr.bf16.mxu0 %v1569
  %1668 = vmatpush1.bf16.msra.mxu0 %v1568
  %1669 = vmatprep.subr.bf16.mxu0 %v1573
  %1670 = vmatpush1.bf16.msra.mxu0 %v1572
  %1671 = vmatprep.subr.bf16.mxu0 %v1577
  %1672 = vmatpush1.bf16.msra.mxu0 %v1576
  %1673 = vmatprep.subr.bf16.mxu0 %v1581
  %1674 = vmatpush1.bf16.msra.mxu0 %v1580
  %1675 = vmatprep.subr.bf16.mxu0 %v1585
  %1676 = vmatpush1.bf16.msra.mxu0 %v1584
  %1677 = vmatprep.subr.bf16.mxu0 %v1589
  %1678 = vmatpush1.bf16.msra.mxu0 %v1588
  %1679 = vmatprep.mubr.bf16.mxu0 %v1601
  %1680 = vmatmul.mubr.bf16.gmra.mrb[0].mxu0 %v1600
  %v1681 = vpop.f32.mrb[0].mxu0
  %v1682 = vadd.f32 %v1641, %v1681
  %v1683 = vpop.f32.mrb[0].mxu0
  %v1684 = vadd.f32 %v1643, %v1683
  %v1685 = vpop.f32.mrb[0].mxu0
  %v1686 = vpop.f32.mrb[0].mxu0
  %1687 = vdwg.mxu0
  %1688 = vmatprep.subr.bf16.mxu0 %v1467
  %1689 = vmatpush1.bf16.msra.mxu0 %v1466
  %1690 = vmatprep.subr.bf16.mxu0 %v1471
  %1691 = vmatpush1.bf16.msra.mxu0 %v1470
  %1692 = vmatprep.subr.bf16.mxu0 %v1475
  %1693 = vmatpush1.bf16.msra.mxu0 %v1474
  %1694 = vmatprep.subr.bf16.mxu0 %v1479
  %1695 = vmatpush1.bf16.msra.mxu0 %v1478
  %1696 = vmatprep.subr.bf16.mxu0 %v1483
  %1697 = vmatpush1.bf16.msra.mxu0 %v1482
  %1698 = vmatprep.subr.bf16.mxu0 %v1487
  %1699 = vmatpush1.bf16.msra.mxu0 %v1486
  %1700 = vmatprep.subr.bf16.mxu0 %v1491
  %1701 = vmatpush1.bf16.msra.mxu0 %v1490
  %1702 = vmatprep.subr.bf16.mxu0 %v1495
  %1703 = vmatpush1.bf16.msra.mxu0 %v1494
  %1704 = vmatprep.subr.bf16.mxu0 %v1499
  %1705 = vmatpush1.bf16.msra.mxu0 %v1498
  %1706 = vmatprep.subr.bf16.mxu0 %v1503
  %1707 = vmatpush1.bf16.msra.mxu0 %v1502
  %1708 = vmatprep.subr.bf16.mxu0 %v1507
  %1709 = vmatpush1.bf16.msra.mxu0 %v1506
  %1710 = vmatprep.subr.bf16.mxu0 %v1511
  %1711 = vmatpush1.bf16.msra.mxu0 %v1510
  %1712 = vmatprep.subr.bf16.mxu0 %v1515
  %1713 = vmatpush1.bf16.msra.mxu0 %v1514
  %1714 = vmatprep.subr.bf16.mxu0 %v1519
  %1715 = vmatpush1.bf16.msra.mxu0 %v1518
  %1716 = vmatprep.subr.bf16.mxu0 %v1523
  %1717 = vmatpush1.bf16.msra.mxu0 %v1522
  %1718 = vmatprep.subr.bf16.mxu0 %v1527
  %1719 = vmatpush1.bf16.msra.mxu0 %v1526
  %1720 = vmatprep.mubr.bf16.mxu0 %v1599
  %1721 = vmatmul.mubr.bf16.gmra.mrb[0].mxu0 %v1598
  %v1722 = vpop.f32.mrb[0].mxu0
  %v1723 = vadd.f32 0.0, %v1722
  %v1724 = vpop.f32.mrb[0].mxu0
  %v1725 = vadd.f32 0.0, %v1724
  %v1726 = vpop.f32.mrb[0].mxu0
  %v1727 = vpop.f32.mrb[0].mxu0
  %1728 = vdwg.mxu0
  %1729 = vmatprep.subr.bf16.mxu0 %v1531
  %1730 = vmatpush1.bf16.msra.mxu0 %v1530
  %1731 = vmatprep.subr.bf16.mxu0 %v1535
  %1732 = vmatpush1.bf16.msra.mxu0 %v1534
  %1733 = vmatprep.subr.bf16.mxu0 %v1539
  %1734 = vmatpush1.bf16.msra.mxu0 %v1538
  %1735 = vmatprep.subr.bf16.mxu0 %v1543
  %1736 = vmatpush1.bf16.msra.mxu0 %v1542
  %1737 = vmatprep.subr.bf16.mxu0 %v1547
  %1738 = vmatpush1.bf16.msra.mxu0 %v1546
  %1739 = vmatprep.subr.bf16.mxu0 %v1551
  %1740 = vmatpush1.bf16.msra.mxu0 %v1550
  %1741 = vmatprep.subr.bf16.mxu0 %v1555
  %1742 = vmatpush1.bf16.msra.mxu0 %v1554
  %1743 = vmatprep.subr.bf16.mxu0 %v1559
  %1744 = vmatpush1.bf16.msra.mxu0 %v1558
  %1745 = vmatprep.subr.bf16.mxu0 %v1563
  %1746 = vmatpush1.bf16.msra.mxu0 %v1562
  %1747 = vmatprep.subr.bf16.mxu0 %v1567
  %1748 = vmatpush1.bf16.msra.mxu0 %v1566
  %1749 = vmatprep.subr.bf16.mxu0 %v1571
  %1750 = vmatpush1.bf16.msra.mxu0 %v1570
  %1751 = vmatprep.subr.bf16.mxu0 %v1575
  %1752 = vmatpush1.bf16.msra.mxu0 %v1574
  %1753 = vmatprep.subr.bf16.mxu0 %v1579
  %1754 = vmatpush1.bf16.msra.mxu0 %v1578
  %1755 = vmatprep.subr.bf16.mxu0 %v1583
  %1756 = vmatpush1.bf16.msra.mxu0 %v1582
  %1757 = vmatprep.subr.bf16.mxu0 %v1587
  %1758 = vmatpush1.bf16.msra.mxu0 %v1586
  %1759 = vmatprep.subr.bf16.mxu0 %v1591
  %1760 = vmatpush1.bf16.msra.mxu0 %v1590
  %1761 = vmatprep.mubr.bf16.mxu0 %v1601
  %1762 = vmatmul.mubr.bf16.gmra.mrb[0].mxu0 %v1600
  %v1763 = vpop.f32.mrb[0].mxu0
  %v1764 = vadd.f32 %v1723, %v1763
  %v1765 = vpop.f32.mrb[0].mxu0
  %v1766 = vadd.f32 %v1725, %v1765
  %v1767 = vpop.f32.mrb[0].mxu0
  %v1768 = vpop.f32.mrb[0].mxu0
  %1769 = vdwg.mxu0
  %v1770 = vpack.c.bf16 %v1682, %v1682
  %v1771 = vpack.c.bf16 %v1684, %v1684
  %v1772 = vpack.c.bf16 %v1764, %v1764
  %v1773 = vpack.c.bf16 %v1766, %v1766
  %v1774 = vld [vmem:[%s4] sm:$0xff]
  %v1775 = vld [vmem:[%s4 + $0x8] sm:$0xff]
  %v1776 = vld [vmem:[%s4 + $0x10] sm:$0xff]
  %v1777 = vld [vmem:[%s4 + $0x18] sm:$0xff]
  %v1778 = vld [vmem:[%s4 + $0x20] sm:$0xff]
  %v1779 = vld [vmem:[%s4 + $0x28] sm:$0xff]
  %v1780 = vld [vmem:[%s4 + $0x30] sm:$0xff]
  %v1781 = vld [vmem:[%s4 + $0x38] sm:$0xff]
  %v1782 = vld [vmem:[%s4 + $0x40] sm:$0xff]
  %v1783 = vld [vmem:[%s4 + $0x48] sm:$0xff]
  %v1784 = vld [vmem:[%s4 + $0x50] sm:$0xff]
  %v1785 = vld [vmem:[%s4 + $0x58] sm:$0xff]
  %v1786 = vld [vmem:[%s4 + $0x60] sm:$0xff]
  %v1787 = vld [vmem:[%s4 + $0x68] sm:$0xff]
  %v1788 = vld [vmem:[%s4 + $0x70] sm:$0xff]
  %v1789 = vld [vmem:[%s4 + $0x78] sm:$0xff]
  %v1790 = vld [vmem:[%s4 + $0x80] sm:$0xff]
  %v1791 = vld [vmem:[%s4 + $0x88] sm:$0xff]
  %v1792 = vld [vmem:[%s4 + $0x90] sm:$0xff]
  %v1793 = vld [vmem:[%s4 + $0x98] sm:$0xff]
  %v1794 = vld [vmem:[%s4 + $0xa0] sm:$0xff]
  %v1795 = vld [vmem:[%s4 + $0xa8] sm:$0xff]
  %v1796 = vld [vmem:[%s4 + $0xb0] sm:$0xff]
  %v1797 = vld [vmem:[%s4 + $0xb8] sm:$0xff]
  %v1798 = vld [vmem:[%s4 + $0xc0] sm:$0xff]
  %v1799 = vld [vmem:[%s4 + $0xc8] sm:$0xff]
  %v1800 = vld [vmem:[%s4 + $0xd0] sm:$0xff]
  %v1801 = vld [vmem:[%s4 + $0xd8] sm:$0xff]
  %v1802 = vld [vmem:[%s4 + $0xe0] sm:$0xff]
  %v1803 = vld [vmem:[%s4 + $0xe8] sm:$0xff]
  %v1804 = vld [vmem:[%s4 + $0xf0] sm:$0xff]
  %v1805 = vld [vmem:[%s4 + $0xf8] sm:$0xff]
  %v1806 = vld [vmem:[%s4 + $0x100] sm:$0xff]
  %v1807 = vld [vmem:[%s4 + $0x108] sm:$0xff]
  %v1808 = vld [vmem:[%s4 + $0x110] sm:$0xff]
  %v1809 = vld [vmem:[%s4 + $0x118] sm:$0xff]
  %v1810 = vld [vmem:[%s4 + $0x120] sm:$0xff]
  %v1811 = vld [vmem:[%s4 + $0x128] sm:$0xff]
  %v1812 = vld [vmem:[%s4 + $0x130] sm:$0xff]
  %v1813 = vld [vmem:[%s4 + $0x138] sm:$0xff]
  %v1814 = vld [vmem:[%s4 + $0x140] sm:$0xff]
  %v1815 = vld [vmem:[%s4 + $0x148] sm:$0xff]
  %v1816 = vld [vmem:[%s4 + $0x150] sm:$0xff]
  %v1817 = vld [vmem:[%s4 + $0x158] sm:$0xff]
  %v1818 = vld [vmem:[%s4 + $0x160] sm:$0xff]
  %v1819 = vld [vmem:[%s4 + $0x168] sm:$0xff]
  %v1820 = vld [vmem:[%s4 + $0x170] sm:$0xff]
  %v1821 = vld [vmem:[%s4 + $0x178] sm:$0xff]
  %v1822 = vld [vmem:[%s4 + $0x180] sm:$0xff]
  %v1823 = vld [vmem:[%s4 + $0x188] sm:$0xff]
  %v1824 = vld [vmem:[%s4 + $0x190] sm:$0xff]
  %v1825 = vld [vmem:[%s4 + $0x198] sm:$0xff]
  %v1826 = vld [vmem:[%s4 + $0x1a0] sm:$0xff]
  %v1827 = vld [vmem:[%s4 + $0x1a8] sm:$0xff]
  %v1828 = vld [vmem:[%s4 + $0x1b0] sm:$0xff]
  %v1829 = vld [vmem:[%s4 + $0x1b8] sm:$0xff]
  %v1830 = vld [vmem:[%s4 + $0x1c0] sm:$0xff]
  %v1831 = vld [vmem:[%s4 + $0x1c8] sm:$0xff]
  %v1832 = vld [vmem:[%s4 + $0x1d0] sm:$0xff]
  %v1833 = vld [vmem:[%s4 + $0x1d8] sm:$0xff]
  %v1834 = vld [vmem:[%s4 + $0x1e0] sm:$0xff]
  %v1835 = vld [vmem:[%s4 + $0x1e8] sm:$0xff]
  %v1836 = vld [vmem:[%s4 + $0x1f0] sm:$0xff]
  %v1837 = vld [vmem:[%s4 + $0x1f8] sm:$0xff]
  %v1838 = vld [vmem:[%s4 + $0x200] sm:$0xff]
  %v1839 = vld [vmem:[%s4 + $0x208] sm:$0xff]
  %v1840 = vld [vmem:[%s4 + $0x210] sm:$0xff]
  %v1841 = vld [vmem:[%s4 + $0x218] sm:$0xff]
  %v1842 = vld [vmem:[%s4 + $0x220] sm:$0xff]
  %v1843 = vld [vmem:[%s4 + $0x228] sm:$0xff]
  %v1844 = vld [vmem:[%s4 + $0x230] sm:$0xff]
  %v1845 = vld [vmem:[%s4 + $0x238] sm:$0xff]
  %v1846 = vld [vmem:[%s4 + $0x240] sm:$0xff]
  %v1847 = vld [vmem:[%s4 + $0x248] sm:$0xff]
  %v1848 = vld [vmem:[%s4 + $0x250] sm:$0xff]
  %v1849 = vld [vmem:[%s4 + $0x258] sm:$0xff]
  %v1850 = vld [vmem:[%s4 + $0x260] sm:$0xff]
  %v1851 = vld [vmem:[%s4 + $0x268] sm:$0xff]
  %v1852 = vld [vmem:[%s4 + $0x270] sm:$0xff]
  %v1853 = vld [vmem:[%s4 + $0x278] sm:$0xff]
  %v1854 = vld [vmem:[%s4 + $0x280] sm:$0xff]
  %v1855 = vld [vmem:[%s4 + $0x288] sm:$0xff]
  %v1856 = vld [vmem:[%s4 + $0x290] sm:$0xff]
  %v1857 = vld [vmem:[%s4 + $0x298] sm:$0xff]
  %v1858 = vld [vmem:[%s4 + $0x2a0] sm:$0xff]
  %v1859 = vld [vmem:[%s4 + $0x2a8] sm:$0xff]
  %v1860 = vld [vmem:[%s4 + $0x2b0] sm:$0xff]
  %v1861 = vld [vmem:[%s4 + $0x2b8] sm:$0xff]
  %v1862 = vld [vmem:[%s4 + $0x2c0] sm:$0xff]
  %v1863 = vld [vmem:[%s4 + $0x2c8] sm:$0xff]
  %v1864 = vld [vmem:[%s4 + $0x2d0] sm:$0xff]
  %v1865 = vld [vmem:[%s4 + $0x2d8] sm:$0xff]
  %v1866 = vld [vmem:[%s4 + $0x2e0] sm:$0xff]
  %v1867 = vld [vmem:[%s4 + $0x2e8] sm:$0xff]
  %v1868 = vld [vmem:[%s4 + $0x2f0] sm:$0xff]
  %v1869 = vld [vmem:[%s4 + $0x2f8] sm:$0xff]
  %v1870 = vld [vmem:[%s4 + $0x300] sm:$0xff]
  %v1871 = vld [vmem:[%s4 + $0x308] sm:$0xff]
  %v1872 = vld [vmem:[%s4 + $0x310] sm:$0xff]
  %v1873 = vld [vmem:[%s4 + $0x318] sm:$0xff]
  %v1874 = vld [vmem:[%s4 + $0x320] sm:$0xff]
  %v1875 = vld [vmem:[%s4 + $0x328] sm:$0xff]
  %v1876 = vld [vmem:[%s4 + $0x330] sm:$0xff]
  %v1877 = vld [vmem:[%s4 + $0x338] sm:$0xff]
  %v1878 = vld [vmem:[%s4 + $0x340] sm:$0xff]
  %v1879 = vld [vmem:[%s4 + $0x348] sm:$0xff]
  %v1880 = vld [vmem:[%s4 + $0x350] sm:$0xff]
  %v1881 = vld [vmem:[%s4 + $0x358] sm:$0xff]
  %v1882 = vld [vmem:[%s4 + $0x360] sm:$0xff]
  %v1883 = vld [vmem:[%s4 + $0x368] sm:$0xff]
  %v1884 = vld [vmem:[%s4 + $0x370] sm:$0xff]
  %v1885 = vld [vmem:[%s4 + $0x378] sm:$0xff]
  %v1886 = vld [vmem:[%s4 + $0x380] sm:$0xff]
  %v1887 = vld [vmem:[%s4 + $0x388] sm:$0xff]
  %v1888 = vld [vmem:[%s4 + $0x390] sm:$0xff]
  %v1889 = vld [vmem:[%s4 + $0x398] sm:$0xff]
  %v1890 = vld [vmem:[%s4 + $0x3a0] sm:$0xff]
  %v1891 = vld [vmem:[%s4 + $0x3a8] sm:$0xff]
  %v1892 = vld [vmem:[%s4 + $0x3b0] sm:$0xff]
  %v1893 = vld [vmem:[%s4 + $0x3b8] sm:$0xff]
  %v1894 = vld [vmem:[%s4 + $0x3c0] sm:$0xff]
  %v1895 = vld [vmem:[%s4 + $0x3c8] sm:$0xff]
  %v1896 = vld [vmem:[%s4 + $0x3d0] sm:$0xff]
  %v1897 = vld [vmem:[%s4 + $0x3d8] sm:$0xff]
  %v1898 = vld [vmem:[%s4 + $0x3e0] sm:$0xff]
  %v1899 = vld [vmem:[%s4 + $0x3e8] sm:$0xff]
  %v1900 = vld [vmem:[%s4 + $0x3f0] sm:$0xff]
  %v1901 = vld [vmem:[%s4 + $0x3f8] sm:$0xff]
  %v1902 = vld [vmem:[%s5] sm:$0xf]
  %v1904 = vlaneseq
  %v1905 = vshrl.u32 %v1904, 7
  %v1906 = vsub.s32 0, %v1905
  %v1907 = vrot.slane %v1902, %v1906
  %v1908 = vlaneseq
  %v1909 = vshrl.u32 %v1908, 7
  %v1910 = vsub.s32 1, %v1909
  %v1911 = vrot.slane %v1902, %v1910
  %v1912 = vlaneseq
  %v1913 = vshrl.u32 %v1912, 7
  %v1914 = vsub.s32 2, %v1913
  %v1915 = vrot.slane %v1902, %v1914
  %v1916 = vlaneseq
  %v1917 = vshrl.u32 %v1916, 7
  %v1918 = vsub.s32 3, %v1917
  %v1919 = vrot.slane %v1902, %v1918
  %v2052 = vunpack.c.l.b16 %v1774
  %v2053 = vunpack.c.h.b16 %v1774
  %v2054 = vunpack.c.l.b16 %v1775
  %v2055 = vunpack.c.h.b16 %v1775
  %v2056 = vunpack.c.l.b16 %v1776
  %v2057 = vunpack.c.h.b16 %v1776
  %v2058 = vunpack.c.l.b16 %v1777
  %v2059 = vunpack.c.h.b16 %v1777
  %v2060 = vunpack.c.l.b16 %v1778
  %v2061 = vunpack.c.h.b16 %v1778
  %v2062 = vunpack.c.l.b16 %v1779
  %v2063 = vunpack.c.h.b16 %v1779
  %v2064 = vunpack.c.l.b16 %v1780
  %v2065 = vunpack.c.h.b16 %v1780
  %v2066 = vunpack.c.l.b16 %v1781
  %v2067 = vunpack.c.h.b16 %v1781
  %v2068 = vunpack.c.l.b16 %v1782
  %v2069 = vunpack.c.h.b16 %v1782
  %v2070 = vunpack.c.l.b16 %v1783
  %v2071 = vunpack.c.h.b16 %v1783
  %v2072 = vunpack.c.l.b16 %v1784
  %v2073 = vunpack.c.h.b16 %v1784
  %v2074 = vunpack.c.l.b16 %v1785
  %v2075 = vunpack.c.h.b16 %v1785
  %v2076 = vunpack.c.l.b16 %v1786
  %v2077 = vunpack.c.h.b16 %v1786
  %v2078 = vunpack.c.l.b16 %v1787
  %v2079 = vunpack.c.h.b16 %v1787
  %v2080 = vunpack.c.l.b16 %v1788
  %v2081 = vunpack.c.h.b16 %v1788
  %v2082 = vunpack.c.l.b16 %v1789
  %v2083 = vunpack.c.h.b16 %v1789
  %v2084 = vunpack.c.l.b16 %v1790
  %v2085 = vunpack.c.h.b16 %v1790
  %v2086 = vunpack.c.l.b16 %v1791
  %v2087 = vunpack.c.h.b16 %v1791
  %v2088 = vunpack.c.l.b16 %v1792
  %v2089 = vunpack.c.h.b16 %v1792
  %v2090 = vunpack.c.l.b16 %v1793
  %v2091 = vunpack.c.h.b16 %v1793
  %v2092 = vunpack.c.l.b16 %v1794
  %v2093 = vunpack.c.h.b16 %v1794
  %v2094 = vunpack.c.l.b16 %v1795
  %v2095 = vunpack.c.h.b16 %v1795
  %v2096 = vunpack.c.l.b16 %v1796
  %v2097 = vunpack.c.h.b16 %v1796
  %v2098 = vunpack.c.l.b16 %v1797
  %v2099 = vunpack.c.h.b16 %v1797
  %v2100 = vunpack.c.l.b16 %v1798
  %v2101 = vunpack.c.h.b16 %v1798
  %v2102 = vunpack.c.l.b16 %v1799
  %v2103 = vunpack.c.h.b16 %v1799
  %v2104 = vunpack.c.l.b16 %v1800
  %v2105 = vunpack.c.h.b16 %v1800
  %v2106 = vunpack.c.l.b16 %v1801
  %v2107 = vunpack.c.h.b16 %v1801
  %v2108 = vunpack.c.l.b16 %v1802
  %v2109 = vunpack.c.h.b16 %v1802
  %v2110 = vunpack.c.l.b16 %v1803
  %v2111 = vunpack.c.h.b16 %v1803
  %v2112 = vunpack.c.l.b16 %v1804
  %v2113 = vunpack.c.h.b16 %v1804
  %v2114 = vunpack.c.l.b16 %v1805
  %v2115 = vunpack.c.h.b16 %v1805
  %v2116 = vunpack.c.l.b16 %v1806
  %v2117 = vunpack.c.h.b16 %v1806
  %v2118 = vunpack.c.l.b16 %v1807
  %v2119 = vunpack.c.h.b16 %v1807
  %v2120 = vunpack.c.l.b16 %v1808
  %v2121 = vunpack.c.h.b16 %v1808
  %v2122 = vunpack.c.l.b16 %v1809
  %v2123 = vunpack.c.h.b16 %v1809
  %v2124 = vunpack.c.l.b16 %v1810
  %v2125 = vunpack.c.h.b16 %v1810
  %v2126 = vunpack.c.l.b16 %v1811
  %v2127 = vunpack.c.h.b16 %v1811
  %v2128 = vunpack.c.l.b16 %v1812
  %v2129 = vunpack.c.h.b16 %v1812
  %v2130 = vunpack.c.l.b16 %v1813
  %v2131 = vunpack.c.h.b16 %v1813
  %v2132 = vunpack.c.l.b16 %v1814
  %v2133 = vunpack.c.h.b16 %v1814
  %v2134 = vunpack.c.l.b16 %v1815
  %v2135 = vunpack.c.h.b16 %v1815
  %v2136 = vunpack.c.l.b16 %v1816
  %v2137 = vunpack.c.h.b16 %v1816
  %v2138 = vunpack.c.l.b16 %v1817
  %v2139 = vunpack.c.h.b16 %v1817
  %v2140 = vunpack.c.l.b16 %v1818
  %v2141 = vunpack.c.h.b16 %v1818
  %v2142 = vunpack.c.l.b16 %v1819
  %v2143 = vunpack.c.h.b16 %v1819
  %v2144 = vunpack.c.l.b16 %v1820
  %v2145 = vunpack.c.h.b16 %v1820
  %v2146 = vunpack.c.l.b16 %v1821
  %v2147 = vunpack.c.h.b16 %v1821
  %v2148 = vunpack.c.l.b16 %v1822
  %v2149 = vunpack.c.h.b16 %v1822
  %v2150 = vunpack.c.l.b16 %v1823
  %v2151 = vunpack.c.h.b16 %v1823
  %v2152 = vunpack.c.l.b16 %v1824
  %v2153 = vunpack.c.h.b16 %v1824
  %v2154 = vunpack.c.l.b16 %v1825
  %v2155 = vunpack.c.h.b16 %v1825
  %v2156 = vunpack.c.l.b16 %v1826
  %v2157 = vunpack.c.h.b16 %v1826
  %v2158 = vunpack.c.l.b16 %v1827
  %v2159 = vunpack.c.h.b16 %v1827
  %v2160 = vunpack.c.l.b16 %v1828
  %v2161 = vunpack.c.h.b16 %v1828
  %v2162 = vunpack.c.l.b16 %v1829
  %v2163 = vunpack.c.h.b16 %v1829
  %v2164 = vunpack.c.l.b16 %v1830
  %v2165 = vunpack.c.h.b16 %v1830
  %v2166 = vunpack.c.l.b16 %v1831
  %v2167 = vunpack.c.h.b16 %v1831
  %v2168 = vunpack.c.l.b16 %v1832
  %v2169 = vunpack.c.h.b16 %v1832
  %v2170 = vunpack.c.l.b16 %v1833
  %v2171 = vunpack.c.h.b16 %v1833
  %v2172 = vunpack.c.l.b16 %v1834
  %v2173 = vunpack.c.h.b16 %v1834
  %v2174 = vunpack.c.l.b16 %v1835
  %v2175 = vunpack.c.h.b16 %v1835
  %v2176 = vunpack.c.l.b16 %v1836
  %v2177 = vunpack.c.h.b16 %v1836
  %v2178 = vunpack.c.l.b16 %v1837
  %v2179 = vunpack.c.h.b16 %v1837
  %v2180 = vunpack.c.l.b16 %v1838
  %v2181 = vunpack.c.h.b16 %v1838
  %v2182 = vunpack.c.l.b16 %v1839
  %v2183 = vunpack.c.h.b16 %v1839
  %v2184 = vunpack.c.l.b16 %v1840
  %v2185 = vunpack.c.h.b16 %v1840
  %v2186 = vunpack.c.l.b16 %v1841
  %v2187 = vunpack.c.h.b16 %v1841
  %v2188 = vunpack.c.l.b16 %v1842
  %v2189 = vunpack.c.h.b16 %v1842
  %v2190 = vunpack.c.l.b16 %v1843
  %v2191 = vunpack.c.h.b16 %v1843
  %v2192 = vunpack.c.l.b16 %v1844
  %v2193 = vunpack.c.h.b16 %v1844
  %v2194 = vunpack.c.l.b16 %v1845
  %v2195 = vunpack.c.h.b16 %v1845
  %v2196 = vunpack.c.l.b16 %v1846
  %v2197 = vunpack.c.h.b16 %v1846
  %v2198 = vunpack.c.l.b16 %v1847
  %v2199 = vunpack.c.h.b16 %v1847
  %v2200 = vunpack.c.l.b16 %v1848
  %v2201 = vunpack.c.h.b16 %v1848
  %v2202 = vunpack.c.l.b16 %v1849
  %v2203 = vunpack.c.h.b16 %v1849
  %v2204 = vunpack.c.l.b16 %v1850
  %v2205 = vunpack.c.h.b16 %v1850
  %v2206 = vunpack.c.l.b16 %v1851
  %v2207 = vunpack.c.h.b16 %v1851
  %v2208 = vunpack.c.l.b16 %v1852
  %v2209 = vunpack.c.h.b16 %v1852
  %v2210 = vunpack.c.l.b16 %v1853
  %v2211 = vunpack.c.h.b16 %v1853
  %v2212 = vunpack.c.l.b16 %v1854
  %v2213 = vunpack.c.h.b16 %v1854
  %v2214 = vunpack.c.l.b16 %v1855
  %v2215 = vunpack.c.h.b16 %v1855
  %v2216 = vunpack.c.l.b16 %v1856
  %v2217 = vunpack.c.h.b16 %v1856
  %v2218 = vunpack.c.l.b16 %v1857
  %v2219 = vunpack.c.h.b16 %v1857
  %v2220 = vunpack.c.l.b16 %v1858
  %v2221 = vunpack.c.h.b16 %v1858
  %v2222 = vunpack.c.l.b16 %v1859
  %v2223 = vunpack.c.h.b16 %v1859
  %v2224 = vunpack.c.l.b16 %v1860
  %v2225 = vunpack.c.h.b16 %v1860
  %v2226 = vunpack.c.l.b16 %v1861
  %v2227 = vunpack.c.h.b16 %v1861
  %v2228 = vunpack.c.l.b16 %v1862
  %v2229 = vunpack.c.h.b16 %v1862
  %v2230 = vunpack.c.l.b16 %v1863
  %v2231 = vunpack.c.h.b16 %v1863
  %v2232 = vunpack.c.l.b16 %v1864
  %v2233 = vunpack.c.h.b16 %v1864
  %v2234 = vunpack.c.l.b16 %v1865
  %v2235 = vunpack.c.h.b16 %v1865
  %v2236 = vunpack.c.l.b16 %v1866
  %v2237 = vunpack.c.h.b16 %v1866
  %v2238 = vunpack.c.l.b16 %v1867
  %v2239 = vunpack.c.h.b16 %v1867
  %v2240 = vunpack.c.l.b16 %v1868
  %v2241 = vunpack.c.h.b16 %v1868
  %v2242 = vunpack.c.l.b16 %v1869
  %v2243 = vunpack.c.h.b16 %v1869
  %v2244 = vunpack.c.l.b16 %v1870
  %v2245 = vunpack.c.h.b16 %v1870
  %v2246 = vunpack.c.l.b16 %v1871
  %v2247 = vunpack.c.h.b16 %v1871
  %v2248 = vunpack.c.l.b16 %v1872
  %v2249 = vunpack.c.h.b16 %v1872
  %v2250 = vunpack.c.l.b16 %v1873
  %v2251 = vunpack.c.h.b16 %v1873
  %v2252 = vunpack.c.l.b16 %v1874
  %v2253 = vunpack.c.h.b16 %v1874
  %v2254 = vunpack.c.l.b16 %v1875
  %v2255 = vunpack.c.h.b16 %v1875
  %v2256 = vunpack.c.l.b16 %v1876
  %v2257 = vunpack.c.h.b16 %v1876
  %v2258 = vunpack.c.l.b16 %v1877
  %v2259 = vunpack.c.h.b16 %v1877
  %v2260 = vunpack.c.l.b16 %v1878
  %v2261 = vunpack.c.h.b16 %v1878
  %v2262 = vunpack.c.l.b16 %v1879
  %v2263 = vunpack.c.h.b16 %v1879
  %v2264 = vunpack.c.l.b16 %v1880
  %v2265 = vunpack.c.h.b16 %v1880
  %v2266 = vunpack.c.l.b16 %v1881
  %v2267 = vunpack.c.h.b16 %v1881
  %v2268 = vunpack.c.l.b16 %v1882
  %v2269 = vunpack.c.h.b16 %v1882
  %v2270 = vunpack.c.l.b16 %v1883
  %v2271 = vunpack.c.h.b16 %v1883
  %v2272 = vunpack.c.l.b16 %v1884
  %v2273 = vunpack.c.h.b16 %v1884
  %v2274 = vunpack.c.l.b16 %v1885
  %v2275 = vunpack.c.h.b16 %v1885
  %v2276 = vunpack.c.l.b16 %v1886
  %v2277 = vunpack.c.h.b16 %v1886
  %v2278 = vunpack.c.l.b16 %v1887
  %v2279 = vunpack.c.h.b16 %v1887
  %v2280 = vunpack.c.l.b16 %v1888
  %v2281 = vunpack.c.h.b16 %v1888
  %v2282 = vunpack.c.l.b16 %v1889
  %v2283 = vunpack.c.h.b16 %v1889
  %v2284 = vunpack.c.l.b16 %v1890
  %v2285 = vunpack.c.h.b16 %v1890
  %v2286 = vunpack.c.l.b16 %v1891
  %v2287 = vunpack.c.h.b16 %v1891
  %v2288 = vunpack.c.l.b16 %v1892
  %v2289 = vunpack.c.h.b16 %v1892
  %v2290 = vunpack.c.l.b16 %v1893
  %v2291 = vunpack.c.h.b16 %v1893
  %v2292 = vunpack.c.l.b16 %v1894
  %v2293 = vunpack.c.h.b16 %v1894
  %v2294 = vunpack.c.l.b16 %v1895
  %v2295 = vunpack.c.h.b16 %v1895
  %v2296 = vunpack.c.l.b16 %v1896
  %v2297 = vunpack.c.h.b16 %v1896
  %v2298 = vunpack.c.l.b16 %v1897
  %v2299 = vunpack.c.h.b16 %v1897
  %v2300 = vunpack.c.l.b16 %v1898
  %v2301 = vunpack.c.h.b16 %v1898
  %v2302 = vunpack.c.l.b16 %v1899
  %v2303 = vunpack.c.h.b16 %v1899
  %v2304 = vunpack.c.l.b16 %v1900
  %v2305 = vunpack.c.h.b16 %v1900
  %v2306 = vunpack.c.l.b16 %v1901
  %v2307 = vunpack.c.h.b16 %v1901
  %v2308 = vpack.c.b16 %v2056, %v2052
  %v2309 = vpack.c.b16 %v2057, %v2053
  %v2310 = vpack.c.b16 %v2058, %v2054
  %v2311 = vpack.c.b16 %v2059, %v2055
  %v2312 = vpack.c.b16 %v2064, %v2060
  %v2313 = vpack.c.b16 %v2065, %v2061
  %v2314 = vpack.c.b16 %v2066, %v2062
  %v2315 = vpack.c.b16 %v2067, %v2063
  %v2316 = vpack.c.b16 %v2072, %v2068
  %v2317 = vpack.c.b16 %v2073, %v2069
  %v2318 = vpack.c.b16 %v2074, %v2070
  %v2319 = vpack.c.b16 %v2075, %v2071
  %v2320 = vpack.c.b16 %v2080, %v2076
  %v2321 = vpack.c.b16 %v2081, %v2077
  %v2322 = vpack.c.b16 %v2082, %v2078
  %v2323 = vpack.c.b16 %v2083, %v2079
  %v2324 = vpack.c.b16 %v2088, %v2084
  %v2325 = vpack.c.b16 %v2089, %v2085
  %v2326 = vpack.c.b16 %v2090, %v2086
  %v2327 = vpack.c.b16 %v2091, %v2087
  %v2328 = vpack.c.b16 %v2096, %v2092
  %v2329 = vpack.c.b16 %v2097, %v2093
  %v2330 = vpack.c.b16 %v2098, %v2094
  %v2331 = vpack.c.b16 %v2099, %v2095
  %v2332 = vpack.c.b16 %v2104, %v2100
  %v2333 = vpack.c.b16 %v2105, %v2101
  %v2334 = vpack.c.b16 %v2106, %v2102
  %v2335 = vpack.c.b16 %v2107, %v2103
  %v2336 = vpack.c.b16 %v2112, %v2108
  %v2337 = vpack.c.b16 %v2113, %v2109
  %v2338 = vpack.c.b16 %v2114, %v2110
  %v2339 = vpack.c.b16 %v2115, %v2111
  %v2340 = vpack.c.b16 %v2120, %v2116
  %v2341 = vpack.c.b16 %v2121, %v2117
  %v2342 = vpack.c.b16 %v2122, %v2118
  %v2343 = vpack.c.b16 %v2123, %v2119
  %v2344 = vpack.c.b16 %v2128, %v2124
  %v2345 = vpack.c.b16 %v2129, %v2125
  %v2346 = vpack.c.b16 %v2130, %v2126
  %v2347 = vpack.c.b16 %v2131, %v2127
  %v2348 = vpack.c.b16 %v2136, %v2132
  %v2349 = vpack.c.b16 %v2137, %v2133
  %v2350 = vpack.c.b16 %v2138, %v2134
  %v2351 = vpack.c.b16 %v2139, %v2135
  %v2352 = vpack.c.b16 %v2144, %v2140
  %v2353 = vpack.c.b16 %v2145, %v2141
  %v2354 = vpack.c.b16 %v2146, %v2142
  %v2355 = vpack.c.b16 %v2147, %v2143
  %v2356 = vpack.c.b16 %v2152, %v2148
  %v2357 = vpack.c.b16 %v2153, %v2149
  %v2358 = vpack.c.b16 %v2154, %v2150
  %v2359 = vpack.c.b16 %v2155, %v2151
  %v2360 = vpack.c.b16 %v2160, %v2156
  %v2361 = vpack.c.b16 %v2161, %v2157
  %v2362 = vpack.c.b16 %v2162, %v2158
  %v2363 = vpack.c.b16 %v2163, %v2159
  %v2364 = vpack.c.b16 %v2168, %v2164
  %v2365 = vpack.c.b16 %v2169, %v2165
  %v2366 = vpack.c.b16 %v2170, %v2166
  %v2367 = vpack.c.b16 %v2171, %v2167
  %v2368 = vpack.c.b16 %v2176, %v2172
  %v2369 = vpack.c.b16 %v2177, %v2173
  %v2370 = vpack.c.b16 %v2178, %v2174
  %v2371 = vpack.c.b16 %v2179, %v2175
  %v2372 = vpack.c.b16 %v2184, %v2180
  %v2373 = vpack.c.b16 %v2185, %v2181
  %v2374 = vpack.c.b16 %v2186, %v2182
  %v2375 = vpack.c.b16 %v2187, %v2183
  %v2376 = vpack.c.b16 %v2192, %v2188
  %v2377 = vpack.c.b16 %v2193, %v2189
  %v2378 = vpack.c.b16 %v2194, %v2190
  %v2379 = vpack.c.b16 %v2195, %v2191
  %v2380 = vpack.c.b16 %v2200, %v2196
  %v2381 = vpack.c.b16 %v2201, %v2197
  %v2382 = vpack.c.b16 %v2202, %v2198
  %v2383 = vpack.c.b16 %v2203, %v2199
  %v2384 = vpack.c.b16 %v2208, %v2204
  %v2385 = vpack.c.b16 %v2209, %v2205
  %v2386 = vpack.c.b16 %v2210, %v2206
  %v2387 = vpack.c.b16 %v2211, %v2207
  %v2388 = vpack.c.b16 %v2216, %v2212
  %v2389 = vpack.c.b16 %v2217, %v2213
  %v2390 = vpack.c.b16 %v2218, %v2214
  %v2391 = vpack.c.b16 %v2219, %v2215
  %v2392 = vpack.c.b16 %v2224, %v2220
  %v2393 = vpack.c.b16 %v2225, %v2221
  %v2394 = vpack.c.b16 %v2226, %v2222
  %v2395 = vpack.c.b16 %v2227, %v2223
  %v2396 = vpack.c.b16 %v2232, %v2228
  %v2397 = vpack.c.b16 %v2233, %v2229
  %v2398 = vpack.c.b16 %v2234, %v2230
  %v2399 = vpack.c.b16 %v2235, %v2231
  %v2400 = vpack.c.b16 %v2240, %v2236
  %v2401 = vpack.c.b16 %v2241, %v2237
  %v2402 = vpack.c.b16 %v2242, %v2238
  %v2403 = vpack.c.b16 %v2243, %v2239
  %v2404 = vpack.c.b16 %v2248, %v2244
  %v2405 = vpack.c.b16 %v2249, %v2245
  %v2406 = vpack.c.b16 %v2250, %v2246
  %v2407 = vpack.c.b16 %v2251, %v2247
  %v2408 = vpack.c.b16 %v2256, %v2252
  %v2409 = vpack.c.b16 %v2257, %v2253
  %v2410 = vpack.c.b16 %v2258, %v2254
  %v2411 = vpack.c.b16 %v2259, %v2255
  %v2412 = vpack.c.b16 %v2264, %v2260
  %v2413 = vpack.c.b16 %v2265, %v2261
  %v2414 = vpack.c.b16 %v2266, %v2262
  %v2415 = vpack.c.b16 %v2267, %v2263
  %v2416 = vpack.c.b16 %v2272, %v2268
  %v2417 = vpack.c.b16 %v2273, %v2269
  %v2418 = vpack.c.b16 %v2274, %v2270
  %v2419 = vpack.c.b16 %v2275, %v2271
  %v2420 = vpack.c.b16 %v2280, %v2276
  %v2421 = vpack.c.b16 %v2281, %v2277
  %v2422 = vpack.c.b16 %v2282, %v2278
  %v2423 = vpack.c.b16 %v2283, %v2279
  %v2424 = vpack.c.b16 %v2288, %v2284
  %v2425 = vpack.c.b16 %v2289, %v2285
  %v2426 = vpack.c.b16 %v2290, %v2286
  %v2427 = vpack.c.b16 %v2291, %v2287
  %v2428 = vpack.c.b16 %v2296, %v2292
  %v2429 = vpack.c.b16 %v2297, %v2293
  %v2430 = vpack.c.b16 %v2298, %v2294
  %v2431 = vpack.c.b16 %v2299, %v2295
  %v2432 = vpack.c.b16 %v2304, %v2300
  %v2433 = vpack.c.b16 %v2305, %v2301
  %v2434 = vpack.c.b16 %v2306, %v2302
  %v2435 = vpack.c.b16 %v2307, %v2303
  %2564 = vmatprep.subr.bf16.mxu0 %v2309
  %2565 = vmatpush1.bf16.msra.mxu0 %v2308
  %2566 = vmatprep.subr.bf16.mxu0 %v2313
  %2567 = vmatpush1.bf16.msra.mxu0 %v2312
  %2568 = vmatprep.subr.bf16.mxu0 %v2317
  %2569 = vmatpush1.bf16.msra.mxu0 %v2316
  %2570 = vmatprep.subr.bf16.mxu0 %v2321
  %2571 = vmatpush1.bf16.msra.mxu0 %v2320
  %2572 = vmatprep.subr.bf16.mxu0 %v2325
  %2573 = vmatpush1.bf16.msra.mxu0 %v2324
  %2574 = vmatprep.subr.bf16.mxu0 %v2329
  %2575 = vmatpush1.bf16.msra.mxu0 %v2328
  %2576 = vmatprep.subr.bf16.mxu0 %v2333
  %2577 = vmatpush1.bf16.msra.mxu0 %v2332
  %2578 = vmatprep.subr.bf16.mxu0 %v2337
  %2579 = vmatpush1.bf16.msra.mxu0 %v2336
  %2580 = vmatprep.subr.bf16.mxu0 %v2341
  %2581 = vmatpush1.bf16.msra.mxu0 %v2340
  %2582 = vmatprep.subr.bf16.mxu0 %v2345
  %2583 = vmatpush1.bf16.msra.mxu0 %v2344
  %2584 = vmatprep.subr.bf16.mxu0 %v2349
  %2585 = vmatpush1.bf16.msra.mxu0 %v2348
  %2586 = vmatprep.subr.bf16.mxu0 %v2353
  %2587 = vmatpush1.bf16.msra.mxu0 %v2352
  %2588 = vmatprep.subr.bf16.mxu0 %v2357
  %2589 = vmatpush1.bf16.msra.mxu0 %v2356
  %2590 = vmatprep.subr.bf16.mxu0 %v2361
  %2591 = vmatpush1.bf16.msra.mxu0 %v2360
  %2592 = vmatprep.subr.bf16.mxu0 %v2365
  %2593 = vmatpush1.bf16.msra.mxu0 %v2364
  %2594 = vmatprep.subr.bf16.mxu0 %v2369
  %2595 = vmatpush1.bf16.msra.mxu0 %v2368
  %2596 = vmatprep.mubr.bf16.mxu0 %v1771
  %2597 = vmatmul.mubr.bf16.gmra.mrb[0].mxu0 %v1770
  %v2598 = vpop.f32.mrb[0].mxu0
  %v2599 = vadd.f32 %v1907, %v2598
  %v2600 = vpop.f32.mrb[0].mxu0
  %v2601 = vadd.f32 %v1911, %v2600
  %v2602 = vpop.f32.mrb[0].mxu0
  %v2603 = vpop.f32.mrb[0].mxu0
  %2604 = vdwg.mxu0
  %2605 = vmatprep.subr.bf16.mxu0 %v2373
  %2606 = vmatpush1.bf16.msra.mxu0 %v2372
  %2607 = vmatprep.subr.bf16.mxu0 %v2377
  %2608 = vmatpush1.bf16.msra.mxu0 %v2376
  %2609 = vmatprep.subr.bf16.mxu0 %v2381
  %2610 = vmatpush1.bf16.msra.mxu0 %v2380
  %2611 = vmatprep.subr.bf16.mxu0 %v2385
  %2612 = vmatpush1.bf16.msra.mxu0 %v2384
  %2613 = vmatprep.subr.bf16.mxu0 %v2389
  %2614 = vmatpush1.bf16.msra.mxu0 %v2388
  %2615 = vmatprep.subr.bf16.mxu0 %v2393
  %2616 = vmatpush1.bf16.msra.mxu0 %v2392
  %2617 = vmatprep.subr.bf16.mxu0 %v2397
  %2618 = vmatpush1.bf16.msra.mxu0 %v2396
  %2619 = vmatprep.subr.bf16.mxu0 %v2401
  %2620 = vmatpush1.bf16.msra.mxu0 %v2400
  %2621 = vmatprep.subr.bf16.mxu0 %v2405
  %2622 = vmatpush1.bf16.msra.mxu0 %v2404
  %2623 = vmatprep.subr.bf16.mxu0 %v2409
  %2624 = vmatpush1.bf16.msra.mxu0 %v2408
  %2625 = vmatprep.subr.bf16.mxu0 %v2413
  %2626 = vmatpush1.bf16.msra.mxu0 %v2412
  %2627 = vmatprep.subr.bf16.mxu0 %v2417
  %2628 = vmatpush1.bf16.msra.mxu0 %v2416
  %2629 = vmatprep.subr.bf16.mxu0 %v2421
  %2630 = vmatpush1.bf16.msra.mxu0 %v2420
  %2631 = vmatprep.subr.bf16.mxu0 %v2425
  %2632 = vmatpush1.bf16.msra.mxu0 %v2424
  %2633 = vmatprep.subr.bf16.mxu0 %v2429
  %2634 = vmatpush1.bf16.msra.mxu0 %v2428
  %2635 = vmatprep.subr.bf16.mxu0 %v2433
  %2636 = vmatpush1.bf16.msra.mxu0 %v2432
  %2637 = vmatprep.mubr.bf16.mxu0 %v1773
  %2638 = vmatmul.mubr.bf16.gmra.mrb[0].mxu0 %v1772
  %v2639 = vpop.f32.mrb[0].mxu0
  %v2640 = vadd.f32 %v2599, %v2639
  %v2641 = vpop.f32.mrb[0].mxu0
  %v2642 = vadd.f32 %v2601, %v2641
  %v2643 = vpop.f32.mrb[0].mxu0
  %v2644 = vpop.f32.mrb[0].mxu0
  %2645 = vdwg.mxu0
  %2646 = vmatprep.subr.bf16.mxu0 %v2311
  %2647 = vmatpush1.bf16.msra.mxu0 %v2310
  %2648 = vmatprep.subr.bf16.mxu0 %v2315
  %2649 = vmatpush1.bf16.msra.mxu0 %v2314
  %2650 = vmatprep.subr.bf16.mxu0 %v2319
  %2651 = vmatpush1.bf16.msra.mxu0 %v2318
  %2652 = vmatprep.subr.bf16.mxu0 %v2323
  %2653 = vmatpush1.bf16.msra.mxu0 %v2322
  %2654 = vmatprep.subr.bf16.mxu0 %v2327
  %2655 = vmatpush1.bf16.msra.mxu0 %v2326
  %2656 = vmatprep.subr.bf16.mxu0 %v2331
  %2657 = vmatpush1.bf16.msra.mxu0 %v2330
  %2658 = vmatprep.subr.bf16.mxu0 %v2335
  %2659 = vmatpush1.bf16.msra.mxu0 %v2334
  %2660 = vmatprep.subr.bf16.mxu0 %v2339
  %2661 = vmatpush1.bf16.msra.mxu0 %v2338
  %2662 = vmatprep.subr.bf16.mxu0 %v2343
  %2663 = vmatpush1.bf16.msra.mxu0 %v2342
  %2664 = vmatprep.subr.bf16.mxu0 %v2347
  %2665 = vmatpush1.bf16.msra.mxu0 %v2346
  %2666 = vmatprep.subr.bf16.mxu0 %v2351
  %2667 = vmatpush1.bf16.msra.mxu0 %v2350
  %2668 = vmatprep.subr.bf16.mxu0 %v2355
  %2669 = vmatpush1.bf16.msra.mxu0 %v2354
  %2670 = vmatprep.subr.bf16.mxu0 %v2359
  %2671 = vmatpush1.bf16.msra.mxu0 %v2358
  %2672 = vmatprep.subr.bf16.mxu0 %v2363
  %2673 = vmatpush1.bf16.msra.mxu0 %v2362
  %2674 = vmatprep.subr.bf16.mxu0 %v2367
  %2675 = vmatpush1.bf16.msra.mxu0 %v2366
  %2676 = vmatprep.subr.bf16.mxu0 %v2371
  %2677 = vmatpush1.bf16.msra.mxu0 %v2370
  %2678 = vmatprep.mubr.bf16.mxu0 %v1771
  %2679 = vmatmul.mubr.bf16.gmra.mrb[0].mxu0 %v1770
  %v2680 = vpop.f32.mrb[0].mxu0
  %v2681 = vadd.f32 %v1915, %v2680
  %v2682 = vpop.f32.mrb[0].mxu0
  %v2683 = vadd.f32 %v1919, %v2682
  %v2684 = vpop.f32.mrb[0].mxu0
  %v2685 = vpop.f32.mrb[0].mxu0
  %2686 = vdwg.mxu0
  %2687 = vmatprep.subr.bf16.mxu0 %v2375
  %2688 = vmatpush1.bf16.msra.mxu0 %v2374
  %2689 = vmatprep.subr.bf16.mxu0 %v2379
  %2690 = vmatpush1.bf16.msra.mxu0 %v2378
  %2691 = vmatprep.subr.bf16.mxu0 %v2383
  %2692 = vmatpush1.bf16.msra.mxu0 %v2382
  %2693 = vmatprep.subr.bf16.mxu0 %v2387
  %2694 = vmatpush1.bf16.msra.mxu0 %v2386
  %2695 = vmatprep.subr.bf16.mxu0 %v2391
  %2696 = vmatpush1.bf16.msra.mxu0 %v2390
  %2697 = vmatprep.subr.bf16.mxu0 %v2395
  %2698 = vmatpush1.bf16.msra.mxu0 %v2394
  %2699 = vmatprep.subr.bf16.mxu0 %v2399
  %2700 = vmatpush1.bf16.msra.mxu0 %v2398
  %2701 = vmatprep.subr.bf16.mxu0 %v2403
  %2702 = vmatpush1.bf16.msra.mxu0 %v2402
  %2703 = vmatprep.subr.bf16.mxu0 %v2407
  %2704 = vmatpush1.bf16.msra.mxu0 %v2406
  %2705 = vmatprep.subr.bf16.mxu0 %v2411
  %2706 = vmatpush1.bf16.msra.mxu0 %v2410
  %2707 = vmatprep.subr.bf16.mxu0 %v2415
  %2708 = vmatpush1.bf16.msra.mxu0 %v2414
  %2709 = vmatprep.subr.bf16.mxu0 %v2419
  %2710 = vmatpush1.bf16.msra.mxu0 %v2418
  %2711 = vmatprep.subr.bf16.mxu0 %v2423
  %2712 = vmatpush1.bf16.msra.mxu0 %v2422
  %2713 = vmatprep.subr.bf16.mxu0 %v2427
  %2714 = vmatpush1.bf16.msra.mxu0 %v2426
  %2715 = vmatprep.subr.bf16.mxu0 %v2431
  %2716 = vmatpush1.bf16.msra.mxu0 %v2430
  %2717 = vmatprep.subr.bf16.mxu0 %v2435
  %2718 = vmatpush1.bf16.msra.mxu0 %v2434
  %2719 = vmatprep.mubr.bf16.mxu0 %v1773
  %2720 = vmatmul.mubr.bf16.gmra.mrb[0].mxu0 %v1772
  %v2721 = vpop.f32.mrb[0].mxu0
  %v2722 = vadd.f32 %v2681, %v2721
  %v2723 = vpop.f32.mrb[0].mxu0
  %v2724 = vadd.f32 %v2683, %v2723
  %v2725 = vpop.f32.mrb[0].mxu0
  %v2726 = vpop.f32.mrb[0].mxu0
  %2727 = vdwg.mxu0
  %v2728 = vmax.f32 %v2640, 0.0
  %v2729 = vmax.f32 %v2642, 0.0
  %v2730 = vmax.f32 %v2722, 0.0
  %v2731 = vmax.f32 %v2724, 0.0
  %v2732 = vpack.c.bf16 %v2728, %v2728
  %v2733 = vpack.c.bf16 %v2729, %v2729
  %v2734 = vpack.c.bf16 %v2730, %v2730
  %v2735 = vpack.c.bf16 %v2731, %v2731
  %v2736 = vld [vmem:[%s6] sm:$0xf]
  %v2737 = vld [vmem:[%s6 + $0x4] sm:$0xf]
  %v2738 = vld [vmem:[%s6 + $0x8] sm:$0xf]
  %v2739 = vld [vmem:[%s6 + $0xc] sm:$0xf]
  %v2740 = vld [vmem:[%s6 + $0x10] sm:$0xf]
  %v2741 = vld [vmem:[%s6 + $0x14] sm:$0xf]
  %v2742 = vld [vmem:[%s6 + $0x18] sm:$0xf]
  %v2743 = vld [vmem:[%s6 + $0x1c] sm:$0xf]
  %v2744 = vld [vmem:[%s6 + $0x20] sm:$0xf]
  %v2745 = vld [vmem:[%s6 + $0x24] sm:$0xf]
  %v2746 = vld [vmem:[%s6 + $0x28] sm:$0xf]
  %v2747 = vld [vmem:[%s6 + $0x2c] sm:$0xf]
  %v2748 = vld [vmem:[%s6 + $0x30] sm:$0xf]
  %v2749 = vld [vmem:[%s6 + $0x34] sm:$0xf]
  %v2750 = vld [vmem:[%s6 + $0x38] sm:$0xf]
  %v2751 = vld [vmem:[%s6 + $0x3c] sm:$0xf]
  %v2752 = vld [vmem:[%s6 + $0x40] sm:$0xf]
  %v2753 = vld [vmem:[%s6 + $0x44] sm:$0xf]
  %v2754 = vld [vmem:[%s6 + $0x48] sm:$0xf]
  %v2755 = vld [vmem:[%s6 + $0x4c] sm:$0xf]
  %v2756 = vld [vmem:[%s6 + $0x50] sm:$0xf]
  %v2757 = vld [vmem:[%s6 + $0x54] sm:$0xf]
  %v2758 = vld [vmem:[%s6 + $0x58] sm:$0xf]
  %v2759 = vld [vmem:[%s6 + $0x5c] sm:$0xf]
  %v2760 = vld [vmem:[%s6 + $0x60] sm:$0xf]
  %v2761 = vld [vmem:[%s6 + $0x64] sm:$0xf]
  %v2762 = vld [vmem:[%s6 + $0x68] sm:$0xf]
  %v2763 = vld [vmem:[%s6 + $0x6c] sm:$0xf]
  %v2764 = vld [vmem:[%s6 + $0x70] sm:$0xf]
  %v2765 = vld [vmem:[%s6 + $0x74] sm:$0xf]
  %v2766 = vld [vmem:[%s6 + $0x78] sm:$0xf]
  %v2767 = vld [vmem:[%s6 + $0x7c] sm:$0xf]
  %v2768 = vld [vmem:[%s6 + $0x80] sm:$0xf]
  %v2769 = vld [vmem:[%s6 + $0x84] sm:$0xf]
  %v2770 = vld [vmem:[%s6 + $0x88] sm:$0xf]
  %v2771 = vld [vmem:[%s6 + $0x8c] sm:$0xf]
  %v2772 = vld [vmem:[%s6 + $0x90] sm:$0xf]
  %v2773 = vld [vmem:[%s6 + $0x94] sm:$0xf]
  %v2774 = vld [vmem:[%s6 + $0x98] sm:$0xf]
  %v2775 = vld [vmem:[%s6 + $0x9c] sm:$0xf]
  %v2776 = vld [vmem:[%s6 + $0xa0] sm:$0xf]
  %v2777 = vld [vmem:[%s6 + $0xa4] sm:$0xf]
  %v2778 = vld [vmem:[%s6 + $0xa8] sm:$0xf]
  %v2779 = vld [vmem:[%s6 + $0xac] sm:$0xf]
  %v2780 = vld [vmem:[%s6 + $0xb0] sm:$0xf]
  %v2781 = vld [vmem:[%s6 + $0xb4] sm:$0xf]
  %v2782 = vld [vmem:[%s6 + $0xb8] sm:$0xf]
  %v2783 = vld [vmem:[%s6 + $0xbc] sm:$0xf]
  %v2784 = vld [vmem:[%s6 + $0xc0] sm:$0xf]
  %v2785 = vld [vmem:[%s6 + $0xc4] sm:$0xf]
  %v2786 = vld [vmem:[%s6 + $0xc8] sm:$0xf]
  %v2787 = vld [vmem:[%s6 + $0xcc] sm:$0xf]
  %v2788 = vld [vmem:[%s6 + $0xd0] sm:$0xf]
  %v2789 = vld [vmem:[%s6 + $0xd4] sm:$0xf]
  %v2790 = vld [vmem:[%s6 + $0xd8] sm:$0xf]
  %v2791 = vld [vmem:[%s6 + $0xdc] sm:$0xf]
  %v2792 = vld [vmem:[%s6 + $0xe0] sm:$0xf]
  %v2793 = vld [vmem:[%s6 + $0xe4] sm:$0xf]
  %v2794 = vld [vmem:[%s6 + $0xe8] sm:$0xf]
  %v2795 = vld [vmem:[%s6 + $0xec] sm:$0xf]
  %v2796 = vld [vmem:[%s6 + $0xf0] sm:$0xf]
  %v2797 = vld [vmem:[%s6 + $0xf4] sm:$0xf]
  %v2798 = vld [vmem:[%s6 + $0xf8] sm:$0xf]
  %v2799 = vld [vmem:[%s6 + $0xfc] sm:$0xf]
  %v2800 = vld [vmem:[%s7] sm:$0x1]
  %v2802 = vlaneseq
  %v2803 = vshrl.u32 %v2802, 7
  %v2804 = vsub.s32 0, %v2803
  %v2805 = vrot.slane %v2800, %v2804
  %v2871 = vunpack.c.l.b16 %v2736
  %v2872 = vunpack.c.l.b16 %v2737
  %v2873 = vunpack.c.l.b16 %v2738
  %v2874 = vunpack.c.l.b16 %v2739
  %v2875 = vunpack.c.l.b16 %v2740
  %v2876 = vunpack.c.l.b16 %v2741
  %v2877 = vunpack.c.l.b16 %v2742
  %v2878 = vunpack.c.l.b16 %v2743
  %v2879 = vunpack.c.l.b16 %v2744
  %v2880 = vunpack.c.l.b16 %v2745
  %v2881 = vunpack.c.l.b16 %v2746
  %v2882 = vunpack.c.l.b16 %v2747
  %v2883 = vunpack.c.l.b16 %v2748
  %v2884 = vunpack.c.l.b16 %v2749
  %v2885 = vunpack.c.l.b16 %v2750
  %v2886 = vunpack.c.l.b16 %v2751
  %v2887 = vunpack.c.l.b16 %v2752
  %v2888 = vunpack.c.l.b16 %v2753
  %v2889 = vunpack.c.l.b16 %v2754
  %v2890 = vunpack.c.l.b16 %v2755
  %v2891 = vunpack.c.l.b16 %v2756
  %v2892 = vunpack.c.l.b16 %v2757
  %v2893 = vunpack.c.l.b16 %v2758
  %v2894 = vunpack.c.l.b16 %v2759
  %v2895 = vunpack.c.l.b16 %v2760
  %v2896 = vunpack.c.l.b16 %v2761
  %v2897 = vunpack.c.l.b16 %v2762
  %v2898 = vunpack.c.l.b16 %v2763
  %v2899 = vunpack.c.l.b16 %v2764
  %v2900 = vunpack.c.l.b16 %v2765
  %v2901 = vunpack.c.l.b16 %v2766
  %v2902 = vunpack.c.l.b16 %v2767
  %v2903 = vunpack.c.l.b16 %v2768
  %v2904 = vunpack.c.l.b16 %v2769
  %v2905 = vunpack.c.l.b16 %v2770
  %v2906 = vunpack.c.l.b16 %v2771
  %v2907 = vunpack.c.l.b16 %v2772
  %v2908 = vunpack.c.l.b16 %v2773
  %v2909 = vunpack.c.l.b16 %v2774
  %v2910 = vunpack.c.l.b16 %v2775
  %v2911 = vunpack.c.l.b16 %v2776
  %v2912 = vunpack.c.l.b16 %v2777
  %v2913 = vunpack.c.l.b16 %v2778
  %v2914 = vunpack.c.l.b16 %v2779
  %v2915 = vunpack.c.l.b16 %v2780
  %v2916 = vunpack.c.l.b16 %v2781
  %v2917 = vunpack.c.l.b16 %v2782
  %v2918 = vunpack.c.l.b16 %v2783
  %v2919 = vunpack.c.l.b16 %v2784
  %v2920 = vunpack.c.l.b16 %v2785
  %v2921 = vunpack.c.l.b16 %v2786
  %v2922 = vunpack.c.l.b16 %v2787
  %v2923 = vunpack.c.l.b16 %v2788
  %v2924 = vunpack.c.l.b16 %v2789
  %v2925 = vunpack.c.l.b16 %v2790
  %v2926 = vunpack.c.l.b16 %v2791
  %v2927 = vunpack.c.l.b16 %v2792
  %v2928 = vunpack.c.l.b16 %v2793
  %v2929 = vunpack.c.l.b16 %v2794
  %v2930 = vunpack.c.l.b16 %v2795
  %v2931 = vunpack.c.l.b16 %v2796
  %v2932 = vunpack.c.l.b16 %v2797
  %v2933 = vunpack.c.l.b16 %v2798
  %v2934 = vunpack.c.l.b16 %v2799
  %v2935 = vpack.c.b16 %v2872, %v2871
  %v2936 = vpack.c.b16 %v2874, %v2873
  %v2937 = vpack.c.b16 %v2876, %v2875
  %v2938 = vpack.c.b16 %v2878, %v2877
  %v2939 = vpack.c.b16 %v2880, %v2879
  %v2940 = vpack.c.b16 %v2882, %v2881
  %v2941 = vpack.c.b16 %v2884, %v2883
  %v2942 = vpack.c.b16 %v2886, %v2885
  %v2943 = vpack.c.b16 %v2888, %v2887
  %v2944 = vpack.c.b16 %v2890, %v2889
  %v2945 = vpack.c.b16 %v2892, %v2891
  %v2946 = vpack.c.b16 %v2894, %v2893
  %v2947 = vpack.c.b16 %v2896, %v2895
  %v2948 = vpack.c.b16 %v2898, %v2897
  %v2949 = vpack.c.b16 %v2900, %v2899
  %v2950 = vpack.c.b16 %v2902, %v2901
  %v2951 = vpack.c.b16 %v2904, %v2903
  %v2952 = vpack.c.b16 %v2906, %v2905
  %v2953 = vpack.c.b16 %v2908, %v2907
  %v2954 = vpack.c.b16 %v2910, %v2909
  %v2955 = vpack.c.b16 %v2912, %v2911
  %v2956 = vpack.c.b16 %v2914, %v2913
  %v2957 = vpack.c.b16 %v2916, %v2915
  %v2958 = vpack.c.b16 %v2918, %v2917
  %v2959 = vpack.c.b16 %v2920, %v2919
  %v2960 = vpack.c.b16 %v2922, %v2921
  %v2961 = vpack.c.b16 %v2924, %v2923
  %v2962 = vpack.c.b16 %v2926, %v2925
  %v2963 = vpack.c.b16 %v2928, %v2927
  %v2964 = vpack.c.b16 %v2930, %v2929
  %v2965 = vpack.c.b16 %v2932, %v2931
  %v2966 = vpack.c.b16 %v2934, %v2933
  %2999 = vmatprep.subr.bf16.mxu0 0
  %3000 = vmatpush1.bf16.msra.mxu0 %v2935
  %3001 = vmatprep.subr.bf16.mxu0 0
  %3002 = vmatpush1.bf16.msra.mxu0 %v2936
  %3003 = vmatprep.subr.bf16.mxu0 0
  %3004 = vmatpush1.bf16.msra.mxu0 %v2937
  %3005 = vmatprep.subr.bf16.mxu0 0
  %3006 = vmatpush1.bf16.msra.mxu0 %v2938
  %3007 = vmatprep.subr.bf16.mxu0 0
  %3008 = vmatpush1.bf16.msra.mxu0 %v2939
  %3009 = vmatprep.subr.bf16.mxu0 0
  %3010 = vmatpush1.bf16.msra.mxu0 %v2940
  %3011 = vmatprep.subr.bf16.mxu0 0
  %3012 = vmatpush1.bf16.msra.mxu0 %v2941
  %3013 = vmatprep.subr.bf16.mxu0 0
  %3014 = vmatpush1.bf16.msra.mxu0 %v2942
  %3015 = vmatprep.subr.bf16.mxu0 0
  %3016 = vmatpush1.bf16.msra.mxu0 %v2943
  %3017 = vmatprep.subr.bf16.mxu0 0
  %3018 = vmatpush1.bf16.msra.mxu0 %v2944
  %3019 = vmatprep.subr.bf16.mxu0 0
  %3020 = vmatpush1.bf16.msra.mxu0 %v2945
  %3021 = vmatprep.subr.bf16.mxu0 0
  %3022 = vmatpush1.bf16.msra.mxu0 %v2946
  %3023 = vmatprep.subr.bf16.mxu0 0
  %3024 = vmatpush1.bf16.msra.mxu0 %v2947
  %3025 = vmatprep.subr.bf16.mxu0 0
  %3026 = vmatpush1.bf16.msra.mxu0 %v2948
  %3027 = vmatprep.subr.bf16.mxu0 0
  %3028 = vmatpush1.bf16.msra.mxu0 %v2949
  %3029 = vmatprep.subr.bf16.mxu0 0
  %3030 = vmatpush1.bf16.msra.mxu0 %v2950
  %3031 = vmatprep.mubr.bf16.mxu0 %v2733
  %3032 = vmatmul.mubr.bf16.gmra.mrb[0].mxu0 %v2732
  %v3033 = vpop.f32.mrb[0].mxu0
  %v3034 = vadd.f32 %v2805, %v3033
  %v3035 = vpop.f32.mrb[0].mxu0
  %v3036 = vpop.f32.mrb[0].mxu0
  %v3037 = vpop.f32.mrb[0].mxu0
  %3038 = vdwg.mxu0
  %3039 = vmatprep.subr.bf16.mxu0 0
  %3040 = vmatpush1.bf16.msra.mxu0 %v2951
  %3041 = vmatprep.subr.bf16.mxu0 0
  %3042 = vmatpush1.bf16.msra.mxu0 %v2952
  %3043 = vmatprep.subr.bf16.mxu0 0
  %3044 = vmatpush1.bf16.msra.mxu0 %v2953
  %3045 = vmatprep.subr.bf16.mxu0 0
  %3046 = vmatpush1.bf16.msra.mxu0 %v2954
  %3047 = vmatprep.subr.bf16.mxu0 0
  %3048 = vmatpush1.bf16.msra.mxu0 %v2955
  %3049 = vmatprep.subr.bf16.mxu0 0
  %3050 = vmatpush1.bf16.msra.mxu0 %v2956
  %3051 = vmatprep.subr.bf16.mxu0 0
  %3052 = vmatpush1.bf16.msra.mxu0 %v2957
  %3053 = vmatprep.subr.bf16.mxu0 0
  %3054 = vmatpush1.bf16.msra.mxu0 %v2958
  %3055 = vmatprep.subr.bf16.mxu0 0
  %3056 = vmatpush1.bf16.msra.mxu0 %v2959
  %3057 = vmatprep.subr.bf16.mxu0 0
  %3058 = vmatpush1.bf16.msra.mxu0 %v2960
  %3059 = vmatprep.subr.bf16.mxu0 0
  %3060 = vmatpush1.bf16.msra.mxu0 %v2961
  %3061 = vmatprep.subr.bf16.mxu0 0
  %3062 = vmatpush1.bf16.msra.mxu0 %v2962
  %3063 = vmatprep.subr.bf16.mxu0 0
  %3064 = vmatpush1.bf16.msra.mxu0 %v2963
  %3065 = vmatprep.subr.bf16.mxu0 0
  %3066 = vmatpush1.bf16.msra.mxu0 %v2964
  %3067 = vmatprep.subr.bf16.mxu0 0
  %3068 = vmatpush1.bf16.msra.mxu0 %v2965
  %3069 = vmatprep.subr.bf16.mxu0 0
  %3070 = vmatpush1.bf16.msra.mxu0 %v2966
  %3071 = vmatprep.mubr.bf16.mxu0 %v2735
  %3072 = vmatmul.mubr.bf16.gmra.mrb[0].mxu0 %v2734
  %v3073 = vpop.f32.mrb[0].mxu0
  %v3074 = vadd.f32 %v3034, %v3073
  %v3075 = vpop.f32.mrb[0].mxu0
  %v3076 = vpop.f32.mrb[0].mxu0
  %v3077 = vpop.f32.mrb[0].mxu0
  %3078 = vdwg.mxu0
  %3079 = vst [vmem:[%s8] sm:$0xff] %v3074
  // Predicated region
  $region34: #{fine_tune_model_forward.1} parent=0 // pred_check
    _
  $region35: #{fine_tune_model_forward.1} parent=0 // pred_check_branch
    %3081 = sbr.rel (0) target = $region37
  $region36: #{fine_tune_model_forward.1} parent=0 // pred_region
    _
  $region37: #{fine_tune_model_forward.1} parent=0 // pred_fallthru
    _
  // Predicated region
  $region38: #{fine_tune_model_forward.1} parent=0 // pred_check
    _
  $region39: #{fine_tune_model_forward.1} parent=0 // pred_check_branch
    %3083 = sbr.rel (0) target = $region41
  $region40: #{fine_tune_model_forward.1} parent=0 // pred_region
    _
  $region41: #{fine_tune_model_forward.1} parent=0 // pred_fallthru
    _

</llo_original>
